<compile_context>
chip_gen: v7x
topology: tpu7x:2x2x1
jax: 0.10.0
libtpu: 0.0.40
codegen_flags: <defaults>
</compile_context>

<pallas_src>
import functools
import math

import jax
import jax.numpy as jnp
from jax.experimental import pallas as pl
from jax.experimental.pallas import tpu as pltpu


def _round_up(x, m):
    return (x + m - 1) // m * m


def _fold_bn(gamma, beta, mean, var, eps=1e-5):
    """Fold inference-mode BatchNorm into per-channel scale & bias."""
    scale = gamma / jnp.sqrt(var + eps)
    bias = beta - mean * scale
    return scale, bias


# --------------------------------------------------------------------------
# Pallas kernel 1: depthwise 3x3 conv + BN(scale,bias) + ReLU, fused.
# Windowing is done in-kernel on the padded NHWC input (VPU elementwise FMA).
# --------------------------------------------------------------------------
def _dw_kernel(x_ref, w_ref, scale_ref, bias_ref, o_ref, *, stride):
    # x_ref: (1, Hp, Wp, ct) f32, w_ref: (3, 3, ct) f32,
    # scale_ref/bias_ref: (1, ct) f32, o_ref: (1, Ho, Wo, ct) bf16
    _, Ho, Wo, ct = o_ref.shape
    acc = jnp.zeros((Ho, Wo, ct), jnp.float32)
    for kh in range(3):
        for kw in range(3):
            win = x_ref[0,
                        kh:kh + (Ho - 1) * stride + 1,
                        kw:kw + (Wo - 1) * stride + 1, :]
            if stride > 1:
                win = win[::stride, ::stride, :]
            wk = w_ref[kh, kw:kw + 1, :]                      # (1, ct)
            acc = acc + win.astype(jnp.float32) * wk
    out = acc * scale_ref[...] + bias_ref[...]
    o_ref[0] = jnp.maximum(out, 0.0).astype(o_ref.dtype)


def depthwise_conv3x3_bn_relu(x_nhwc, w_dw, scale, bias, *, stride):
    """x_nhwc: (B,H,W,Cp) f32 (Cp % 128 == 0), w_dw: (3,3,Cp), scale/bias: (Cp,).
    Returns (B, Ho, Wo, Cp) bf16 (ready to be the MXU A operand)."""
    B, H, W, Cp = x_nhwc.shape
    Ho = (H + 2 - 3) // stride + 1
    Wo = (W + 2 - 3) // stride + 1
    xp = jnp.pad(x_nhwc, ((0, 0), (1, 1), (1, 1), (0, 0)))   # spatial zero pad
    Hp, Wp = H + 2, W + 2
    ct = 128
    scale2 = scale.reshape(1, Cp).astype(jnp.float32)
    bias2 = bias.reshape(1, Cp).astype(jnp.float32)

    return pl.pallas_call(
        functools.partial(_dw_kernel, stride=stride),
        out_shape=jax.ShapeDtypeStruct((B, Ho, Wo, Cp), jnp.bfloat16),
        grid=(B, Cp // ct),
        in_specs=[
            pl.BlockSpec((1, Hp, Wp, ct), lambda b, c: (b, 0, 0, c)),
            pl.BlockSpec((3, 3, ct), lambda b, c: (0, 0, c)),
            pl.BlockSpec((1, ct), lambda b, c: (0, c)),
            pl.BlockSpec((1, ct), lambda b, c: (0, c)),
        ],
        out_specs=pl.BlockSpec((1, Ho, Wo, ct), lambda b, c: (b, 0, 0, c)),
        compiler_params=pltpu.CompilerParams(
            dimension_semantics=("parallel", "parallel")),
        cost_estimate=pl.CostEstimate(
            flops=2 * 9 * B * Ho * Wo * Cp,
            transcendentals=0,
            bytes_accessed=xp.size * 4 + B * Ho * Wo * Cp * 2),
    )(xp, w_dw.astype(jnp.float32), scale2, bias2)


# --------------------------------------------------------------------------
# Pallas kernel 2: pointwise 1x1 conv as MXU matmul (bf16 in, f32 acc)
# with fused BN scale/bias + ReLU epilogue.
# --------------------------------------------------------------------------
def _pw_kernel_single(a_ref, w_ref, scale_ref, bias_ref, o_ref):
    # K fits a single tile: no accumulator scratch, no init/finalize branches.
    acc = jnp.dot(a_ref[...], w_ref[...], preferred_element_type=jnp.float32)
    o_ref[...] = jnp.maximum(acc * scale_ref[...] + bias_ref[...],
                             0.0).astype(o_ref.dtype)


def _pw_kernel_multi(a_ref, w_ref, scale_ref, bias_ref, o_ref, acc_ref):
    k = pl.program_id(2)

    @pl.when(k == 0)
    def _():
        acc_ref[...] = jnp.zeros_like(acc_ref)

    acc_ref[...] += jnp.dot(a_ref[...], w_ref[...],
                            preferred_element_type=jnp.float32)

    @pl.when(k == pl.num_programs(2) - 1)
    def _():
        o_ref[...] = jnp.maximum(acc_ref[...] * scale_ref[...] + bias_ref[...],
                                 0.0).astype(o_ref.dtype)


def pointwise_conv_bn_relu(a_bf16, w, scale, bias):
    """a_bf16: (M, Kp) bf16, w: (Kp, Np) f32, scale/bias: (Np,) f32 -> (M, Np) f32.
    Kp and Np are already padded to multiples of 128 (zero rows/cols)."""
    M, Kp = a_bf16.shape
    _, Np = w.shape
    w_bf16 = w.astype(jnp.bfloat16)

    tm = min(512, _round_up(M, 8))
    Mp = _round_up(M, tm)
    if Mp != M:
        a_bf16 = jnp.pad(a_bf16, ((0, Mp - M), (0, 0)))
    tn = 256 if Np % 256 == 0 else 128

    scale2 = scale.reshape(1, Np).astype(jnp.float32)
    bias2 = bias.reshape(1, Np).astype(jnp.float32)
    cost = pl.CostEstimate(flops=2 * Mp * Np * Kp, transcendentals=0,
                           bytes_accessed=Mp * Kp * 2 + Kp * Np * 2 + Mp * Np * 4)

    if Kp <= 512:
        out = pl.pallas_call(
            _pw_kernel_single,
            out_shape=jax.ShapeDtypeStruct((Mp, Np), jnp.float32),
            grid=(Mp // tm, Np // tn),
            in_specs=[
                pl.BlockSpec((tm, Kp), lambda i, j: (i, 0)),
                pl.BlockSpec((Kp, tn), lambda i, j: (0, j)),
                pl.BlockSpec((1, tn), lambda i, j: (0, j)),
                pl.BlockSpec((1, tn), lambda i, j: (0, j)),
            ],
            out_specs=pl.BlockSpec((tm, tn), lambda i, j: (i, j)),
            compiler_params=pltpu.CompilerParams(
                dimension_semantics=("parallel", "parallel")),
            cost_estimate=cost,
        )(a_bf16, w_bf16, scale2, bias2)
    else:
        tk = 128
        out = pl.pallas_call(
            _pw_kernel_multi,
            out_shape=jax.ShapeDtypeStruct((Mp, Np), jnp.float32),
            grid=(Mp // tm, Np // tn, Kp // tk),
            in_specs=[
                pl.BlockSpec((tm, tk), lambda i, j, k: (i, k)),
                pl.BlockSpec((tk, tn), lambda i, j, k: (k, j)),
                pl.BlockSpec((1, tn), lambda i, j, k: (0, j)),
                pl.BlockSpec((1, tn), lambda i, j, k: (0, j)),
            ],
            out_specs=pl.BlockSpec((tm, tn), lambda i, j, k: (i, j)),
            scratch_shapes=[pltpu.VMEM((tm, tn), jnp.float32)],
            compiler_params=pltpu.CompilerParams(
                dimension_semantics=("parallel", "parallel", "arbitrary")),
            cost_estimate=cost,
        )(a_bf16, w_bf16, scale2, bias2)

    return out[:M] if Mp != M else out


# --------------------------------------------------------------------------
# Block forward: depthwise 3x3 + BN + ReLU, pointwise 1x1 + BN + ReLU.
# External layout NCHW (PyTorch); NHWC + padded channels internally.
# --------------------------------------------------------------------------
@functools.partial(jax.jit, static_argnames=("stride",))
def block_forward(params, x, *, stride=1):
    B, Cin, H, W = x.shape
    Cout = params["conv2_w"].shape[0]
    Cp = _round_up(Cin, 128)
    Np = _round_up(Cout, 128)

    scale1, bias1 = _fold_bn(params["bn1_gamma"], params["bn1_beta"],
                             params["bn1_mean"], params["bn1_var"])
    scale2, bias2 = _fold_bn(params["bn2_gamma"], params["bn2_beta"],
                             params["bn2_mean"], params["bn2_var"])

    # Single boundary transpose; channels padded to 128 for the whole block.
    x_nhwc = jnp.pad(x.transpose(0, 2, 3, 1),
                     ((0, 0), (0, 0), (0, 0), (0, Cp - Cin)))

    # Depthwise weights (Cin,1,3,3) -> (3,3,Cp); padded channels get zero weight.
    w_dw = jnp.pad(params["conv1_w"].reshape(Cin, 3, 3).transpose(1, 2, 0),
                   ((0, 0), (0, 0), (0, Cp - Cin)))
    s1 = jnp.pad(scale1, (0, Cp - Cin))
    b1 = jnp.pad(bias1, (0, Cp - Cin))

    h = depthwise_conv3x3_bn_relu(x_nhwc, w_dw, s1, b1, stride=stride)
    _, Ho, Wo, _ = h.shape

    # Pointwise weights (Cout,Cin,1,1) -> (Cp, Np); zero K rows / N cols.
    w_pw = jnp.pad(params["conv2_w"].reshape(Cout, Cin).T,
                   ((0, Cp - Cin), (0, Np - Cout)))
    s2 = jnp.pad(scale2, (0, Np - Cout))
    b2 = jnp.pad(bias2, (0, Np - Cout))

    a = h.reshape(B * Ho * Wo, Cp)                 # free reshape (NHWC, bf16)
    o = pointwise_conv_bn_relu(a, w_pw, s2, b2)    # (M, Np) f32
    o = o.reshape(B, Ho, Wo, Np)[..., :Cout].transpose(0, 3, 1, 2)
    return o


# Pure-JAX reference (for correctness check in __main__).
def block_reference(params, x, *, stride=1):
    s1, b1 = _fold_bn(params["bn1_gamma"], params["bn1_beta"],
                      params["bn1_mean"], params["bn1_var"])
    s2, b2 = _fold_bn(params["bn2_gamma"], params["bn2_beta"],
                      params["bn2_mean"], params["bn2_var"])
    dn = ("NCHW", "OIHW", "NCHW")
    h = jax.lax.conv_general_dilated(x, params["conv1_w"], (stride, stride),
                                     ((1, 1), (1, 1)), dimension_numbers=dn,
                                     feature_group_count=x.shape[1])
    h = jnp.maximum(h * s1[None, :, None, None] + b1[None, :, None, None], 0.0)
    o = jax.lax.conv_general_dilated(h, params["conv2_w"], (1, 1),
                                     ((0, 0), (0, 0)), dimension_numbers=dn)
    o = jnp.maximum(o * s2[None, :, None, None] + b2[None, :, None, None], 0.0)
    return o


def init_block_params(key, in_planes, out_planes):
    k1, k2, k3, k4, k5, k6, k7, k8 = jax.random.split(key, 8)
    bnd1 = math.sqrt(1.0 / 9.0)            # kaiming_uniform(a=sqrt(5)), fan_in=9
    bnd2 = math.sqrt(1.0 / in_planes)      # fan_in = in_planes for 1x1 conv
    return {
        "conv1_w": jax.random.uniform(k1, (in_planes, 1, 3, 3), jnp.float32,
                                      -bnd1, bnd1),
        "conv2_w": jax.random.uniform(k2, (out_planes, in_planes, 1, 1),
                                      jnp.float32, -bnd2, bnd2),
        "bn1_gamma": jax.random.uniform(k3, (in_planes,), jnp.float32, 0.8, 1.2),
        "bn1_beta": 0.1 * jax.random.normal(k4, (in_planes,), jnp.float32),
        "bn1_mean": 0.1 * jax.random.normal(k5, (in_planes,), jnp.float32),
        "bn1_var": jax.random.uniform(k6, (in_planes,), jnp.float32, 0.8, 1.2),
        "bn2_gamma": jax.random.uniform(k7, (out_planes,), jnp.float32, 0.8, 1.2),
        "bn2_beta": 0.1 * jax.random.normal(k8, (out_planes,), jnp.float32),
        "bn2_mean": jnp.zeros((out_planes,), jnp.float32),
        "bn2_var": jnp.ones((out_planes,), jnp.float32),
    }


if __name__ == "__main__":
    key = jax.random.PRNGKey(0)
    pkey, xkey = jax.random.split(key)

    in_planes, out_planes, stride = 32, 64, 1
    B, H, W = 2, 16, 16

    params = init_block_params(pkey, in_planes, out_planes)
    x = jax.random.normal(xkey, (B, in_planes, H, W), jnp.float32)

    y = block_forward(params, x, stride=stride)
    y = jax.block_until_ready(y)

    Ho = (H + 2 - 3) // stride + 1
    Wo = (W + 2 - 3) // stride + 1
    assert y.shape == (B, out_planes, Ho, Wo), y.shape
    assert bool(jnp.all(jnp.isfinite(y)))
    assert bool(jnp.all(y >= 0.0))

    y_ref = block_reference(params, x, stride=stride)
    assert bool(jnp.allclose(y, y_ref, atol=5e-2, rtol=5e-2))

    print("KERNEL_OK")
</pallas_src>

<mosaic_0001>
module attributes {stable_mosaic.version = 11 : i64} {
  func.func @_dw_kernel(%arg0: i32, %arg1: i32, %arg2: memref<1x18x18x128xf32, #tpu.memory_space<vmem>>, %arg3: memref<3x3x128xf32, #tpu.memory_space<vmem>>, %arg4: memref<1x128xf32, #tpu.memory_space<vmem>>, %arg5: memref<1x128xf32, #tpu.memory_space<vmem>>, %arg6: memref<1x16x16x128xbf16, #tpu.memory_space<vmem>>) attributes {dimension_semantics = [#tpu.dimension_semantics<parallel>, #tpu.dimension_semantics<parallel>], iteration_bounds = array<i64: 2, 1>, scalar_prefetch = 0 : i64, scratch_operands = 0 : i64, tpu.core_type = #tpu.core_type<tc>, window_params = [{transform_indices = @transform_0, window_bounds = array<i64: 1, 18, 18, 128>}, {transform_indices = @transform_1, window_bounds = array<i64: 3, 3, 128>}, {transform_indices = @transform_2, window_bounds = array<i64: 1, 128>}, {transform_indices = @transform_3, window_bounds = array<i64: 1, 128>}, {transform_indices = @transform_4, window_bounds = array<i64: 1, 16, 16, 128>}]} {
    %cst = arith.constant 0.000000e+00 : f32
    %0 = vector.broadcast %cst : f32 to vector<16x16x128xf32>
    %c0 = arith.constant 0 : index
    %c0_0 = arith.constant 0 : index
    %c0_1 = arith.constant 0 : index
    %c0_2 = arith.constant 0 : index
    %1 = vector.load %arg2[%c0, %c0_0, %c0_1, %c0_2] : memref<1x18x18x128xf32, #tpu.memory_space<vmem>>, vector<1x16x16x128xf32>
    %2 = vector.shape_cast %1 : vector<1x16x16x128xf32> to vector<16x16x128xf32>
    %c0_3 = arith.constant 0 : index
    %c0_4 = arith.constant 0 : index
    %c0_5 = arith.constant 0 : index
    %3 = vector.load %arg3[%c0_3, %c0_4, %c0_5] : memref<3x3x128xf32, #tpu.memory_space<vmem>>, vector<1x1x128xf32>
    %4 = vector.shape_cast %3 : vector<1x1x128xf32> to vector<1x128xf32>
    %5 = vector.shape_cast %4 : vector<1x128xf32> to vector<1x1x128xf32>
    %6 = vector.broadcast %5 : vector<1x1x128xf32> to vector<16x16x128xf32>
    %7 = arith.mulf %2, %6 : vector<16x16x128xf32>
    %8 = arith.addf %0, %7 : vector<16x16x128xf32>
    %c0_6 = arith.constant 0 : index
    %c0_7 = arith.constant 0 : index
    %c1 = arith.constant 1 : index
    %c0_8 = arith.constant 0 : index
    %9 = vector.load %arg2[%c0_6, %c0_7, %c1, %c0_8] : memref<1x18x18x128xf32, #tpu.memory_space<vmem>>, vector<1x16x16x128xf32>
    %10 = vector.shape_cast %9 : vector<1x16x16x128xf32> to vector<16x16x128xf32>
    %c0_9 = arith.constant 0 : index
    %c1_10 = arith.constant 1 : index
    %c0_11 = arith.constant 0 : index
    %11 = vector.load %arg3[%c0_9, %c1_10, %c0_11] : memref<3x3x128xf32, #tpu.memory_space<vmem>>, vector<1x1x128xf32>
    %12 = vector.shape_cast %11 : vector<1x1x128xf32> to vector<1x128xf32>
    %13 = vector.shape_cast %12 : vector<1x128xf32> to vector<1x1x128xf32>
    %14 = vector.broadcast %13 : vector<1x1x128xf32> to vector<16x16x128xf32>
    %15 = arith.mulf %10, %14 : vector<16x16x128xf32>
    %16 = arith.addf %8, %15 : vector<16x16x128xf32>
    %c0_12 = arith.constant 0 : index
    %c0_13 = arith.constant 0 : index
    %c2 = arith.constant 2 : index
    %c0_14 = arith.constant 0 : index
    %17 = vector.load %arg2[%c0_12, %c0_13, %c2, %c0_14] : memref<1x18x18x128xf32, #tpu.memory_space<vmem>>, vector<1x16x16x128xf32>
    %18 = vector.shape_cast %17 : vector<1x16x16x128xf32> to vector<16x16x128xf32>
    %c0_15 = arith.constant 0 : index
    %c2_16 = arith.constant 2 : index
    %c0_17 = arith.constant 0 : index
    %19 = vector.load %arg3[%c0_15, %c2_16, %c0_17] : memref<3x3x128xf32, #tpu.memory_space<vmem>>, vector<1x1x128xf32>
    %20 = vector.shape_cast %19 : vector<1x1x128xf32> to vector<1x128xf32>
    %21 = vector.shape_cast %20 : vector<1x128xf32> to vector<1x1x128xf32>
    %22 = vector.broadcast %21 : vector<1x1x128xf32> to vector<16x16x128xf32>
    %23 = arith.mulf %18, %22 : vector<16x16x128xf32>
    %24 = arith.addf %16, %23 : vector<16x16x128xf32>
    %c0_18 = arith.constant 0 : index
    %c1_19 = arith.constant 1 : index
    %c0_20 = arith.constant 0 : index
    %c0_21 = arith.constant 0 : index
    %25 = vector.load %arg2[%c0_18, %c1_19, %c0_20, %c0_21] : memref<1x18x18x128xf32, #tpu.memory_space<vmem>>, vector<1x16x16x128xf32>
    %26 = vector.shape_cast %25 : vector<1x16x16x128xf32> to vector<16x16x128xf32>
    %c1_22 = arith.constant 1 : index
    %c0_23 = arith.constant 0 : index
    %c0_24 = arith.constant 0 : index
    %27 = vector.load %arg3[%c1_22, %c0_23, %c0_24] : memref<3x3x128xf32, #tpu.memory_space<vmem>>, vector<1x1x128xf32>
    %28 = vector.shape_cast %27 : vector<1x1x128xf32> to vector<1x128xf32>
    %29 = vector.shape_cast %28 : vector<1x128xf32> to vector<1x1x128xf32>
    %30 = vector.broadcast %29 : vector<1x1x128xf32> to vector<16x16x128xf32>
    %31 = arith.mulf %26, %30 : vector<16x16x128xf32>
    %32 = arith.addf %24, %31 : vector<16x16x128xf32>
    %c0_25 = arith.constant 0 : index
    %c1_26 = arith.constant 1 : index
    %c1_27 = arith.constant 1 : index
    %c0_28 = arith.constant 0 : index
    %33 = vector.load %arg2[%c0_25, %c1_26, %c1_27, %c0_28] : memref<1x18x18x128xf32, #tpu.memory_space<vmem>>, vector<1x16x16x128xf32>
    %34 = vector.shape_cast %33 : vector<1x16x16x128xf32> to vector<16x16x128xf32>
    %c1_29 = arith.constant 1 : index
    %c1_30 = arith.constant 1 : index
    %c0_31 = arith.constant 0 : index
    %35 = vector.load %arg3[%c1_29, %c1_30, %c0_31] : memref<3x3x128xf32, #tpu.memory_space<vmem>>, vector<1x1x128xf32>
    %36 = vector.shape_cast %35 : vector<1x1x128xf32> to vector<1x128xf32>
    %37 = vector.shape_cast %36 : vector<1x128xf32> to vector<1x1x128xf32>
    %38 = vector.broadcast %37 : vector<1x1x128xf32> to vector<16x16x128xf32>
    %39 = arith.mulf %34, %38 : vector<16x16x128xf32>
    %40 = arith.addf %32, %39 : vector<16x16x128xf32>
    %c0_32 = arith.constant 0 : index
    %c1_33 = arith.constant 1 : index
    %c2_34 = arith.constant 2 : index
    %c0_35 = arith.constant 0 : index
    %41 = vector.load %arg2[%c0_32, %c1_33, %c2_34, %c0_35] : memref<1x18x18x128xf32, #tpu.memory_space<vmem>>, vector<1x16x16x128xf32>
    %42 = vector.shape_cast %41 : vector<1x16x16x128xf32> to vector<16x16x128xf32>
    %c1_36 = arith.constant 1 : index
    %c2_37 = arith.constant 2 : index
    %c0_38 = arith.constant 0 : index
    %43 = vector.load %arg3[%c1_36, %c2_37, %c0_38] : memref<3x3x128xf32, #tpu.memory_space<vmem>>, vector<1x1x128xf32>
    %44 = vector.shape_cast %43 : vector<1x1x128xf32> to vector<1x128xf32>
    %45 = vector.shape_cast %44 : vector<1x128xf32> to vector<1x1x128xf32>
    %46 = vector.broadcast %45 : vector<1x1x128xf32> to vector<16x16x128xf32>
    %47 = arith.mulf %42, %46 : vector<16x16x128xf32>
    %48 = arith.addf %40, %47 : vector<16x16x128xf32>
    %c0_39 = arith.constant 0 : index
    %c2_40 = arith.constant 2 : index
    %c0_41 = arith.constant 0 : index
    %c0_42 = arith.constant 0 : index
    %49 = vector.load %arg2[%c0_39, %c2_40, %c0_41, %c0_42] : memref<1x18x18x128xf32, #tpu.memory_space<vmem>>, vector<1x16x16x128xf32>
    %50 = vector.shape_cast %49 : vector<1x16x16x128xf32> to vector<16x16x128xf32>
    %c2_43 = arith.constant 2 : index
    %c0_44 = arith.constant 0 : index
    %c0_45 = arith.constant 0 : index
    %51 = vector.load %arg3[%c2_43, %c0_44, %c0_45] : memref<3x3x128xf32, #tpu.memory_space<vmem>>, vector<1x1x128xf32>
    %52 = vector.shape_cast %51 : vector<1x1x128xf32> to vector<1x128xf32>
    %53 = vector.shape_cast %52 : vector<1x128xf32> to vector<1x1x128xf32>
    %54 = vector.broadcast %53 : vector<1x1x128xf32> to vector<16x16x128xf32>
    %55 = arith.mulf %50, %54 : vector<16x16x128xf32>
    %56 = arith.addf %48, %55 : vector<16x16x128xf32>
    %c0_46 = arith.constant 0 : index
    %c2_47 = arith.constant 2 : index
    %c1_48 = arith.constant 1 : index
    %c0_49 = arith.constant 0 : index
    %57 = vector.load %arg2[%c0_46, %c2_47, %c1_48, %c0_49] : memref<1x18x18x128xf32, #tpu.memory_space<vmem>>, vector<1x16x16x128xf32>
    %58 = vector.shape_cast %57 : vector<1x16x16x128xf32> to vector<16x16x128xf32>
    %c2_50 = arith.constant 2 : index
    %c1_51 = arith.constant 1 : index
    %c0_52 = arith.constant 0 : index
    %59 = vector.load %arg3[%c2_50, %c1_51, %c0_52] : memref<3x3x128xf32, #tpu.memory_space<vmem>>, vector<1x1x128xf32>
    %60 = vector.shape_cast %59 : vector<1x1x128xf32> to vector<1x128xf32>
    %61 = vector.shape_cast %60 : vector<1x128xf32> to vector<1x1x128xf32>
    %62 = vector.broadcast %61 : vector<1x1x128xf32> to vector<16x16x128xf32>
    %63 = arith.mulf %58, %62 : vector<16x16x128xf32>
    %64 = arith.addf %56, %63 : vector<16x16x128xf32>
    %c0_53 = arith.constant 0 : index
    %c2_54 = arith.constant 2 : index
    %c2_55 = arith.constant 2 : index
    %c0_56 = arith.constant 0 : index
    %65 = vector.load %arg2[%c0_53, %c2_54, %c2_55, %c0_56] : memref<1x18x18x128xf32, #tpu.memory_space<vmem>>, vector<1x16x16x128xf32>
    %66 = vector.shape_cast %65 : vector<1x16x16x128xf32> to vector<16x16x128xf32>
    %c2_57 = arith.constant 2 : index
    %c2_58 = arith.constant 2 : index
    %c0_59 = arith.constant 0 : index
    %67 = vector.load %arg3[%c2_57, %c2_58, %c0_59] : memref<3x3x128xf32, #tpu.memory_space<vmem>>, vector<1x1x128xf32>
    %68 = vector.shape_cast %67 : vector<1x1x128xf32> to vector<1x128xf32>
    %69 = vector.shape_cast %68 : vector<1x128xf32> to vector<1x1x128xf32>
    %70 = vector.broadcast %69 : vector<1x1x128xf32> to vector<16x16x128xf32>
    %71 = arith.mulf %66, %70 : vector<16x16x128xf32>
    %72 = arith.addf %64, %71 : vector<16x16x128xf32>
    %c0_60 = arith.constant 0 : index
    %c0_61 = arith.constant 0 : index
    %73 = vector.load %arg4[%c0_60, %c0_61] : memref<1x128xf32, #tpu.memory_space<vmem>>, vector<1x128xf32>
    %74 = vector.shape_cast %73 : vector<1x128xf32> to vector<1x1x128xf32>
    %75 = vector.broadcast %74 : vector<1x1x128xf32> to vector<16x16x128xf32>
    %76 = arith.mulf %72, %75 : vector<16x16x128xf32>
    %c0_62 = arith.constant 0 : index
    %c0_63 = arith.constant 0 : index
    %77 = vector.load %arg5[%c0_62, %c0_63] : memref<1x128xf32, #tpu.memory_space<vmem>>, vector<1x128xf32>
    %78 = vector.shape_cast %77 : vector<1x128xf32> to vector<1x1x128xf32>
    %79 = vector.broadcast %78 : vector<1x1x128xf32> to vector<16x16x128xf32>
    %80 = arith.addf %76, %79 : vector<16x16x128xf32>
    %cst_64 = arith.constant 0.000000e+00 : f32
    %81 = vector.broadcast %cst_64 : f32 to vector<16x16x128xf32>
    %82 = arith.maximumf %80, %81 : vector<16x16x128xf32>
    %83 = arith.truncf %82 : vector<16x16x128xf32> to vector<16x16x128xbf16>
    %c0_65 = arith.constant 0 : index
    %c0_66 = arith.constant 0 : index
    %c0_67 = arith.constant 0 : index
    %c0_68 = arith.constant 0 : index
    %84 = vector.load %arg6[%c0_65, %c0_66, %c0_67, %c0_68] : memref<1x16x16x128xbf16, #tpu.memory_space<vmem>>, vector<1x16x16x128xbf16>
    %85 = vector.shape_cast %84 : vector<1x16x16x128xbf16> to vector<16x16x128xbf16>
    %86 = vector.shape_cast %83 : vector<16x16x128xbf16> to vector<1x16x16x128xbf16>
    tpu.vector_store %arg6[%c0_65, %c0_66, %c0_67, %c0_68], %86 {strides = array<i32>} : memref<1x16x16x128xbf16, #tpu.memory_space<vmem>>, vector<1x16x16x128xbf16>,
    return
  }
  func.func @transform_0(%arg0: i32, %arg1: i32) -> (i32, i32, i32, i32) {
    %c0_i32 = arith.constant 0 : i32
    %c0_i32_0 = arith.constant 0 : i32
    %c0_i32_1 = arith.constant 0 : i32
    return %arg0, %c0_i32, %c0_i32_0, %arg1 : i32, i32, i32, i32
  }
  func.func @transform_1(%arg0: i32, %arg1: i32) -> (i32, i32, i32) {
    %c0_i32 = arith.constant 0 : i32
    %c0_i32_0 = arith.constant 0 : i32
    %c0_i32_1 = arith.constant 0 : i32
    return %c0_i32, %c0_i32_0, %arg1 : i32, i32, i32
  }
  func.func @transform_2(%arg0: i32, %arg1: i32) -> (i32, i32) {
    %c0_i32 = arith.constant 0 : i32
    %c0_i32_0 = arith.constant 0 : i32
    return %c0_i32, %arg1 : i32, i32
  }
  func.func @transform_3(%arg0: i32, %arg1: i32) -> (i32, i32) {
    %c0_i32 = arith.constant 0 : i32
    %c0_i32_0 = arith.constant 0 : i32
    return %c0_i32, %arg1 : i32, i32
  }
  func.func @transform_4(%arg0: i32, %arg1: i32) -> (i32, i32, i32, i32) {
    %c0_i32 = arith.constant 0 : i32
    %c0_i32_0 = arith.constant 0 : i32
    %c0_i32_1 = arith.constant 0 : i32
    return %arg0, %c0_i32, %c0_i32_0, %arg1 : i32, i32, i32, i32
  }
}

module attributes {stable_mosaic.version = 11 : i64} {
  func.func @_pw_kernel_single(%arg0: i32, %arg1: i32, %arg2: memref<512x128xbf16, #tpu.memory_space<vmem>>, %arg3: memref<128x128xbf16, #tpu.memory_space<vmem>>, %arg4: memref<1x128xf32, #tpu.memory_space<vmem>>, %arg5: memref<1x128xf32, #tpu.memory_space<vmem>>, %arg6: memref<512x128xf32, #tpu.memory_space<vmem>>) attributes {dimension_semantics = [#tpu.dimension_semantics<parallel>, #tpu.dimension_semantics<parallel>], iteration_bounds = array<i64: 1, 1>, scalar_prefetch = 0 : i64, scratch_operands = 0 : i64, tpu.core_type = #tpu.core_type<tc>, window_params = [{transform_indices = @transform_0, window_bounds = array<i64: 512, 128>}, {transform_indices = @transform_1, window_bounds = array<i64: 128, 128>}, {transform_indices = @transform_2, window_bounds = array<i64: 1, 128>}, {transform_indices = @transform_3, window_bounds = array<i64: 1, 128>}, {transform_indices = @transform_4, window_bounds = array<i64: 512, 128>}]} {
    %c0 = arith.constant 0 : index
    %c0_0 = arith.constant 0 : index
    %0 = vector.load %arg2[%c0, %c0_0] : memref<512x128xbf16, #tpu.memory_space<vmem>>, vector<512x128xbf16>
    %c0_1 = arith.constant 0 : index
    %c0_2 = arith.constant 0 : index
    %1 = vector.load %arg3[%c0_1, %c0_2] : memref<128x128xbf16, #tpu.memory_space<vmem>>, vector<128x128xbf16>
    %cst = arith.constant dense<0.000000e+00> : vector<512x128xf32>
    %2 = tpu.matmul %0, %1, %cst {dimension_numbers = #tpu.dot_dimension_numbers<[1], [0], [0], [1], [0, 0, 1, 1], [], []>} : vector<512x128xbf16>, vector<128x128xbf16>, vector<512x128xf32> -> vector<512x128xf32>
    %c0_3 = arith.constant 0 : index
    %c0_4 = arith.constant 0 : index
    %3 = vector.load %arg4[%c0_3, %c0_4] : memref<1x128xf32, #tpu.memory_space<vmem>>, vector<1x128xf32>
    %4 = vector.broadcast %3 : vector<1x128xf32> to vector<512x128xf32>
    %5 = arith.mulf %2, %4 : vector<512x128xf32>
    %c0_5 = arith.constant 0 : index
    %c0_6 = arith.constant 0 : index
    %6 = vector.load %arg5[%c0_5, %c0_6] : memref<1x128xf32, #tpu.memory_space<vmem>>, vector<1x128xf32>
    %7 = vector.broadcast %6 : vector<1x128xf32> to vector<512x128xf32>
    %8 = arith.addf %5, %7 : vector<512x128xf32>
    %cst_7 = arith.constant 0.000000e+00 : f32
    %9 = vector.broadcast %cst_7 : f32 to vector<512x128xf32>
    %10 = arith.maximumf %8, %9 : vector<512x128xf32>
    %c0_8 = arith.constant 0 : index
    %c0_9 = arith.constant 0 : index
    %11 = vector.load %arg6[%c0_8, %c0_9] : memref<512x128xf32, #tpu.memory_space<vmem>>, vector<512x128xf32>
    tpu.vector_store %arg6[%c0_8, %c0_9], %10 {strides = array<i32>} : memref<512x128xf32, #tpu.memory_space<vmem>>, vector<512x128xf32>,
    return
  }
  func.func @transform_0(%arg0: i32, %arg1: i32) -> (i32, i32) {
    %c0_i32 = arith.constant 0 : i32
    %c0_i32_0 = arith.constant 0 : i32
    return %arg0, %c0_i32 : i32, i32
  }
  func.func @transform_1(%arg0: i32, %arg1: i32) -> (i32, i32) {
    %c0_i32 = arith.constant 0 : i32
    %c0_i32_0 = arith.constant 0 : i32
    return %c0_i32, %arg1 : i32, i32
  }
  func.func @transform_2(%arg0: i32, %arg1: i32) -> (i32, i32) {
    %c0_i32 = arith.constant 0 : i32
    %c0_i32_0 = arith.constant 0 : i32
    return %c0_i32, %arg1 : i32, i32
  }
  func.func @transform_3(%arg0: i32, %arg1: i32) -> (i32, i32) {
    %c0_i32 = arith.constant 0 : i32
    %c0_i32_0 = arith.constant 0 : i32
    return %c0_i32, %arg1 : i32, i32
  }
  func.func @transform_4(%arg0: i32, %arg1: i32) -> (i32, i32) {
    %c0_i32 = arith.constant 0 : i32
    return %arg0, %arg1 : i32, i32
  }
}

</mosaic_0001>

<llo_original>
// kernel: block_forward.3
$region0: #{block_forward.3}
  #allocation0 [shape = 'u32[]', space=smem, size = 0x4, offset = 0x4, fixed_abs, tag = 'smem constant byte address 0x4 - core index']
  #allocation1 [shape = 'u32[144,128]{1,0:T(1,128)}', space=vmem, size = 0x12000, scoped, tag = 'internal scratch']
  %s0 = inlined_call_operand.vmem [shape: bf16[512,128], index: 0, kind: input, shape index: {}]
  %s1 = inlined_call_operand.vmem [shape: bf16[128,128], index: 1, kind: input, shape index: {}]
  %s2 = inlined_call_operand.vmem [shape: f32[1,128], index: 2, kind: input, shape index: {}]
  %s3 = inlined_call_operand.vmem [shape: f32[1,128], index: 3, kind: input, shape index: {}]
  %s4 = inlined_call_operand.vmem [shape: f32[512,128], index: 4, kind: output, shape index: {}]
  %s5 = sld [smem:[#allocation0]]
  $region26: #{block_forward.3} parent=0
    _
  %s7 = ssub.s32 1, %s5
  %s8 = scalar_select 0, %s7, %s5
  // Predicated region
  $region2: #{block_forward.3} parent=0 // pred_check
    _
  $region3: #{block_forward.3} parent=0 // pred_check_branch
    %10 = sbr.rel (0) target = $region5
  $region4: #{block_forward.3} parent=0 // pred_region
    _
  $region5: #{block_forward.3} parent=0 // pred_fallthru
    _
  // Predicated region
  $region6: #{block_forward.3} parent=0 // pred_check
    _
  $region7: #{block_forward.3} parent=0 // pred_check_branch
    %12 = sbr.rel (0) target = $region9
  $region8: #{block_forward.3} parent=0 // pred_region
    _
  $region9: #{block_forward.3} parent=0 // pred_fallthru
    _
  // Predicated region
  $region10: #{block_forward.3} parent=0 // pred_check
    _
  $region11: #{block_forward.3} parent=0 // pred_check_branch
    %14 = sbr.rel (0) target = $region13
  $region12: #{block_forward.3} parent=0 // pred_region
    _
  $region13: #{block_forward.3} parent=0 // pred_fallthru
    _
  // Predicated region
  $region14: #{block_forward.3} parent=0 // pred_check
    _
  $region15: #{block_forward.3} parent=0 // pred_check_branch
    %16 = sbr.rel (0) target = $region17
  $region16: #{block_forward.3} parent=0 // pred_region
    _
  $region17: #{block_forward.3} parent=0 // pred_fallthru
    _
  %v18 = vld [vmem:[%s0] sm:$0xf]
  %v19 = vld [vmem:[%s0 + $0x4] sm:$0xf]
  %v20 = vld [vmem:[%s0 + $0x8] sm:$0xf]
  %v21 = vld [vmem:[%s0 + $0xc] sm:$0xf]
  %v22 = vld [vmem:[%s0 + $0x10] sm:$0xf]
  %v23 = vld [vmem:[%s0 + $0x14] sm:$0xf]
  %v24 = vld [vmem:[%s0 + $0x18] sm:$0xf]
  %v25 = vld [vmem:[%s0 + $0x1c] sm:$0xf]
  %v26 = vld [vmem:[%s0 + $0x20] sm:$0xf]
  %v27 = vld [vmem:[%s0 + $0x24] sm:$0xf]
  %v28 = vld [vmem:[%s0 + $0x28] sm:$0xf]
  %v29 = vld [vmem:[%s0 + $0x2c] sm:$0xf]
  %v30 = vld [vmem:[%s0 + $0x30] sm:$0xf]
  %v31 = vld [vmem:[%s0 + $0x34] sm:$0xf]
  %v32 = vld [vmem:[%s0 + $0x38] sm:$0xf]
  %v33 = vld [vmem:[%s0 + $0x3c] sm:$0xf]
  %v34 = vld [vmem:[%s0 + $0x40] sm:$0xf]
  %v35 = vld [vmem:[%s0 + $0x44] sm:$0xf]
  %v36 = vld [vmem:[%s0 + $0x48] sm:$0xf]
  %v37 = vld [vmem:[%s0 + $0x4c] sm:$0xf]
  %v38 = vld [vmem:[%s0 + $0x50] sm:$0xf]
  %v39 = vld [vmem:[%s0 + $0x54] sm:$0xf]
  %v40 = vld [vmem:[%s0 + $0x58] sm:$0xf]
  %v41 = vld [vmem:[%s0 + $0x5c] sm:$0xf]
  %v42 = vld [vmem:[%s0 + $0x60] sm:$0xf]
  %v43 = vld [vmem:[%s0 + $0x64] sm:$0xf]
  %v44 = vld [vmem:[%s0 + $0x68] sm:$0xf]
  %v45 = vld [vmem:[%s0 + $0x6c] sm:$0xf]
  %v46 = vld [vmem:[%s0 + $0x70] sm:$0xf]
  %v47 = vld [vmem:[%s0 + $0x74] sm:$0xf]
  %v48 = vld [vmem:[%s0 + $0x78] sm:$0xf]
  %v49 = vld [vmem:[%s0 + $0x7c] sm:$0xf]
  %v50 = vld [vmem:[%s0 + $0x80] sm:$0xf]
  %v51 = vld [vmem:[%s0 + $0x84] sm:$0xf]
  %v52 = vld [vmem:[%s0 + $0x88] sm:$0xf]
  %v53 = vld [vmem:[%s0 + $0x8c] sm:$0xf]
  %v54 = vld [vmem:[%s0 + $0x90] sm:$0xf]
  %v55 = vld [vmem:[%s0 + $0x94] sm:$0xf]
  %v56 = vld [vmem:[%s0 + $0x98] sm:$0xf]
  %v57 = vld [vmem:[%s0 + $0x9c] sm:$0xf]
  %v58 = vld [vmem:[%s0 + $0xa0] sm:$0xf]
  %v59 = vld [vmem:[%s0 + $0xa4] sm:$0xf]
  %v60 = vld [vmem:[%s0 + $0xa8] sm:$0xf]
  %v61 = vld [vmem:[%s0 + $0xac] sm:$0xf]
  %v62 = vld [vmem:[%s0 + $0xb0] sm:$0xf]
  %v63 = vld [vmem:[%s0 + $0xb4] sm:$0xf]
  %v64 = vld [vmem:[%s0 + $0xb8] sm:$0xf]
  %v65 = vld [vmem:[%s0 + $0xbc] sm:$0xf]
  %v66 = vld [vmem:[%s0 + $0xc0] sm:$0xf]
  %v67 = vld [vmem:[%s0 + $0xc4] sm:$0xf]
  %v68 = vld [vmem:[%s0 + $0xc8] sm:$0xf]
  %v69 = vld [vmem:[%s0 + $0xcc] sm:$0xf]
  %v70 = vld [vmem:[%s0 + $0xd0] sm:$0xf]
  %v71 = vld [vmem:[%s0 + $0xd4] sm:$0xf]
  %v72 = vld [vmem:[%s0 + $0xd8] sm:$0xf]
  %v73 = vld [vmem:[%s0 + $0xdc] sm:$0xf]
  %v74 = vld [vmem:[%s0 + $0xe0] sm:$0xf]
  %v75 = vld [vmem:[%s0 + $0xe4] sm:$0xf]
  %v76 = vld [vmem:[%s0 + $0xe8] sm:$0xf]
  %v77 = vld [vmem:[%s0 + $0xec] sm:$0xf]
  %v78 = vld [vmem:[%s0 + $0xf0] sm:$0xf]
  %v79 = vld [vmem:[%s0 + $0xf4] sm:$0xf]
  %v80 = vld [vmem:[%s0 + $0xf8] sm:$0xf]
  %v81 = vld [vmem:[%s0 + $0xfc] sm:$0xf]
  %v82 = vld [vmem:[%s1] sm:$0xf]
  %v83 = vld [vmem:[%s1 + $0x4] sm:$0xf]
  %v84 = vld [vmem:[%s1 + $0x8] sm:$0xf]
  %v85 = vld [vmem:[%s1 + $0xc] sm:$0xf]
  %v86 = vld [vmem:[%s1 + $0x10] sm:$0xf]
  %v87 = vld [vmem:[%s1 + $0x14] sm:$0xf]
  %v88 = vld [vmem:[%s1 + $0x18] sm:$0xf]
  %v89 = vld [vmem:[%s1 + $0x1c] sm:$0xf]
  %v90 = vld [vmem:[%s1 + $0x20] sm:$0xf]
  %v91 = vld [vmem:[%s1 + $0x24] sm:$0xf]
  %v92 = vld [vmem:[%s1 + $0x28] sm:$0xf]
  %v93 = vld [vmem:[%s1 + $0x2c] sm:$0xf]
  %v94 = vld [vmem:[%s1 + $0x30] sm:$0xf]
  %v95 = vld [vmem:[%s1 + $0x34] sm:$0xf]
  %v96 = vld [vmem:[%s1 + $0x38] sm:$0xf]
  %v97 = vld [vmem:[%s1 + $0x3c] sm:$0xf]
  %v162 = vunpack.c.l.b16 %v18
  %v163 = vunpack.c.l.b16 %v19
  %v164 = vunpack.c.l.b16 %v20
  %v165 = vunpack.c.l.b16 %v21
  %v166 = vunpack.c.l.b16 %v22
  %v167 = vunpack.c.l.b16 %v23
  %v168 = vunpack.c.l.b16 %v24
  %v169 = vunpack.c.l.b16 %v25
  %v170 = vunpack.c.l.b16 %v26
  %v171 = vunpack.c.l.b16 %v27
  %v172 = vunpack.c.l.b16 %v28
  %v173 = vunpack.c.l.b16 %v29
  %v174 = vunpack.c.l.b16 %v30
  %v175 = vunpack.c.l.b16 %v31
  %v176 = vunpack.c.l.b16 %v32
  %v177 = vunpack.c.l.b16 %v33
  %v178 = vunpack.c.l.b16 %v34
  %v179 = vunpack.c.l.b16 %v35
  %v180 = vunpack.c.l.b16 %v36
  %v181 = vunpack.c.l.b16 %v37
  %v182 = vunpack.c.l.b16 %v38
  %v183 = vunpack.c.l.b16 %v39
  %v184 = vunpack.c.l.b16 %v40
  %v185 = vunpack.c.l.b16 %v41
  %v186 = vunpack.c.l.b16 %v42
  %v187 = vunpack.c.l.b16 %v43
  %v188 = vunpack.c.l.b16 %v44
  %v189 = vunpack.c.l.b16 %v45
  %v190 = vunpack.c.l.b16 %v46
  %v191 = vunpack.c.l.b16 %v47
  %v192 = vunpack.c.l.b16 %v48
  %v193 = vunpack.c.l.b16 %v49
  %v194 = vunpack.c.l.b16 %v50
  %v195 = vunpack.c.l.b16 %v51
  %v196 = vunpack.c.l.b16 %v52
  %v197 = vunpack.c.l.b16 %v53
  %v198 = vunpack.c.l.b16 %v54
  %v199 = vunpack.c.l.b16 %v55
  %v200 = vunpack.c.l.b16 %v56
  %v201 = vunpack.c.l.b16 %v57
  %v202 = vunpack.c.l.b16 %v58
  %v203 = vunpack.c.l.b16 %v59
  %v204 = vunpack.c.l.b16 %v60
  %v205 = vunpack.c.l.b16 %v61
  %v206 = vunpack.c.l.b16 %v62
  %v207 = vunpack.c.l.b16 %v63
  %v208 = vunpack.c.l.b16 %v64
  %v209 = vunpack.c.l.b16 %v65
  %v210 = vunpack.c.l.b16 %v66
  %v211 = vunpack.c.l.b16 %v67
  %v212 = vunpack.c.l.b16 %v68
  %v213 = vunpack.c.l.b16 %v69
  %v214 = vunpack.c.l.b16 %v70
  %v215 = vunpack.c.l.b16 %v71
  %v216 = vunpack.c.l.b16 %v72
  %v217 = vunpack.c.l.b16 %v73
  %v218 = vunpack.c.l.b16 %v74
  %v219 = vunpack.c.l.b16 %v75
  %v220 = vunpack.c.l.b16 %v76
  %v221 = vunpack.c.l.b16 %v77
  %v222 = vunpack.c.l.b16 %v78
  %v223 = vunpack.c.l.b16 %v79
  %v224 = vunpack.c.l.b16 %v80
  %v225 = vunpack.c.l.b16 %v81
  %v226 = vpack.c.b16 %v163, %v162
  %v227 = vpack.c.b16 %v165, %v164
  %v228 = vpack.c.b16 %v167, %v166
  %v229 = vpack.c.b16 %v169, %v168
  %v230 = vpack.c.b16 %v171, %v170
  %v231 = vpack.c.b16 %v173, %v172
  %v232 = vpack.c.b16 %v175, %v174
  %v233 = vpack.c.b16 %v177, %v176
  %v234 = vpack.c.b16 %v179, %v178
  %v235 = vpack.c.b16 %v181, %v180
  %v236 = vpack.c.b16 %v183, %v182
  %v237 = vpack.c.b16 %v185, %v184
  %v238 = vpack.c.b16 %v187, %v186
  %v239 = vpack.c.b16 %v189, %v188
  %v240 = vpack.c.b16 %v191, %v190
  %v241 = vpack.c.b16 %v193, %v192
  %v242 = vpack.c.b16 %v195, %v194
  %v243 = vpack.c.b16 %v197, %v196
  %v244 = vpack.c.b16 %v199, %v198
  %v245 = vpack.c.b16 %v201, %v200
  %v246 = vpack.c.b16 %v203, %v202
  %v247 = vpack.c.b16 %v205, %v204
  %v248 = vpack.c.b16 %v207, %v206
  %v249 = vpack.c.b16 %v209, %v208
  %v250 = vpack.c.b16 %v211, %v210
  %v251 = vpack.c.b16 %v213, %v212
  %v252 = vpack.c.b16 %v215, %v214
  %v253 = vpack.c.b16 %v217, %v216
  %v254 = vpack.c.b16 %v219, %v218
  %v255 = vpack.c.b16 %v221, %v220
  %v256 = vpack.c.b16 %v223, %v222
  %v257 = vpack.c.b16 %v225, %v224
  %v306 = vunpack.c.l.b16 %v82
  %v307 = vunpack.c.l.b16 %v83
  %v308 = vunpack.c.l.b16 %v84
  %v309 = vunpack.c.l.b16 %v85
  %v310 = vunpack.c.l.b16 %v86
  %v311 = vunpack.c.l.b16 %v87
  %v312 = vunpack.c.l.b16 %v88
  %v313 = vunpack.c.l.b16 %v89
  %v314 = vunpack.c.l.b16 %v90
  %v315 = vunpack.c.l.b16 %v91
  %v316 = vunpack.c.l.b16 %v92
  %v317 = vunpack.c.l.b16 %v93
  %v318 = vunpack.c.l.b16 %v94
  %v319 = vunpack.c.l.b16 %v95
  %v320 = vunpack.c.l.b16 %v96
  %v321 = vunpack.c.l.b16 %v97
  %v322 = vpack.c.b16 %v307, %v306
  %v323 = vpack.c.b16 %v309, %v308
  %v324 = vpack.c.b16 %v311, %v310
  %v325 = vpack.c.b16 %v313, %v312
  %v326 = vpack.c.b16 %v315, %v314
  %v327 = vpack.c.b16 %v317, %v316
  %v328 = vpack.c.b16 %v319, %v318
  %v329 = vpack.c.b16 %v321, %v320
  %338 = vmatprep.subr.bf16.mxu0 0
  %339 = vmatpush1.bf16.msra.mxu0 %v322
  %340 = vmatprep.subr.bf16.mxu0 0
  %341 = vmatpush1.bf16.msra.mxu0 %v323
  %342 = vmatprep.subr.bf16.mxu0 0
  %343 = vmatpush1.bf16.msra.mxu0 %v324
  %344 = vmatprep.subr.bf16.mxu0 0
  %345 = vmatpush1.bf16.msra.mxu0 %v325
  %346 = vmatprep.subr.bf16.mxu0 0
  %347 = vmatpush1.bf16.msra.mxu0 %v326
  %348 = vmatprep.subr.bf16.mxu0 0
  %349 = vmatpush1.bf16.msra.mxu0 %v327
  %350 = vmatprep.subr.bf16.mxu0 0
  %351 = vmatpush1.bf16.msra.mxu0 %v328
  %352 = vmatprep.subr.bf16.mxu0 0
  %353 = vmatpush1.bf16.msra.mxu0 %v329
  %354 = vmatprep.subr.bf16.mxu0 0
  %355 = vmatpush1.bf16.msra.mxu0 0
  %356 = vmatprep.subr.bf16.mxu0 0
  %357 = vmatpush1.bf16.msra.mxu0 0
  %358 = vmatprep.subr.bf16.mxu0 0
  %359 = vmatpush1.bf16.msra.mxu0 0
  %360 = vmatprep.subr.bf16.mxu0 0
  %361 = vmatpush1.bf16.msra.mxu0 0
  %362 = vmatprep.subr.bf16.mxu0 0
  %363 = vmatpush1.bf16.msra.mxu0 0
  %364 = vmatprep.subr.bf16.mxu0 0
  %365 = vmatpush1.bf16.msra.mxu0 0
  %366 = vmatprep.subr.bf16.mxu0 0
  %367 = vmatpush1.bf16.msra.mxu0 0
  %368 = vmatprep.subr.bf16.mxu0 0
  %369 = vmatpush1.bf16.msra.mxu0 0
  %370 = vmatprep.mubr.bf16.mxu0 0
  %371 = vmatmul.mubr.bf16.gmra.mrb[0].mxu0 %v226
  %v372 = vpop.f32.mrb[0].mxu0
  %v373 = vadd.f32 0.0, %v372
  %v374 = vpop.f32.mrb[0].mxu0
  %v375 = vpop.f32.mrb[0].mxu0
  %v376 = vadd.f32 0.0, %v375
  %v377 = vpop.f32.mrb[0].mxu0
  %378 = vmatprep.mubr.bf16.mxu0 0
  %379 = vmatmul.mubr.bf16.gmra.mrb[0].mxu0 %v227
  %v380 = vpop.f32.mrb[0].mxu0
  %v381 = vadd.f32 0.0, %v380
  %v382 = vpop.f32.mrb[0].mxu0
  %v383 = vpop.f32.mrb[0].mxu0
  %v384 = vadd.f32 0.0, %v383
  %v385 = vpop.f32.mrb[0].mxu0
  %386 = vmatprep.mubr.bf16.mxu0 0
  %387 = vmatmul.mubr.bf16.gmra.mrb[0].mxu0 %v228
  %v388 = vpop.f32.mrb[0].mxu0
  %v389 = vadd.f32 0.0, %v388
  %v390 = vpop.f32.mrb[0].mxu0
  %v391 = vpop.f32.mrb[0].mxu0
  %v392 = vadd.f32 0.0, %v391
  %v393 = vpop.f32.mrb[0].mxu0
  %394 = vmatprep.mubr.bf16.mxu0 0
  %395 = vmatmul.mubr.bf16.gmra.mrb[0].mxu0 %v229
  %v396 = vpop.f32.mrb[0].mxu0
  %v397 = vadd.f32 0.0, %v396
  %v398 = vpop.f32.mrb[0].mxu0
  %v399 = vpop.f32.mrb[0].mxu0
  %v400 = vadd.f32 0.0, %v399
  %v401 = vpop.f32.mrb[0].mxu0
  %402 = vmatprep.mubr.bf16.mxu0 0
  %403 = vmatmul.mubr.bf16.gmra.mrb[0].mxu0 %v230
  %v404 = vpop.f32.mrb[0].mxu0
  %v405 = vadd.f32 0.0, %v404
  %v406 = vpop.f32.mrb[0].mxu0
  %v407 = vpop.f32.mrb[0].mxu0
  %v408 = vadd.f32 0.0, %v407
  %v409 = vpop.f32.mrb[0].mxu0
  %410 = vmatprep.mubr.bf16.mxu0 0
  %411 = vmatmul.mubr.bf16.gmra.mrb[0].mxu0 %v231
  %v412 = vpop.f32.mrb[0].mxu0
  %v413 = vadd.f32 0.0, %v412
  %v414 = vpop.f32.mrb[0].mxu0
  %v415 = vpop.f32.mrb[0].mxu0
  %v416 = vadd.f32 0.0, %v415
  %v417 = vpop.f32.mrb[0].mxu0
  %418 = vmatprep.mubr.bf16.mxu0 0
  %419 = vmatmul.mubr.bf16.gmra.mrb[0].mxu0 %v232
  %v420 = vpop.f32.mrb[0].mxu0
  %v421 = vadd.f32 0.0, %v420
  %v422 = vpop.f32.mrb[0].mxu0
  %v423 = vpop.f32.mrb[0].mxu0
  %v424 = vadd.f32 0.0, %v423
  %v425 = vpop.f32.mrb[0].mxu0
  %426 = vmatprep.mubr.bf16.mxu0 0
  %427 = vmatmul.mubr.bf16.gmra.mrb[0].mxu0 %v233
  %v428 = vpop.f32.mrb[0].mxu0
  %v429 = vadd.f32 0.0, %v428
  %v430 = vpop.f32.mrb[0].mxu0
  %v431 = vpop.f32.mrb[0].mxu0
  %v432 = vadd.f32 0.0, %v431
  %v433 = vpop.f32.mrb[0].mxu0
  %434 = vmatprep.mubr.bf16.mxu0 0
  %435 = vmatmul.mubr.bf16.gmra.mrb[0].mxu0 %v234
  %v436 = vpop.f32.mrb[0].mxu0
  %v437 = vadd.f32 0.0, %v436
  %v438 = vpop.f32.mrb[0].mxu0
  %v439 = vpop.f32.mrb[0].mxu0
  %v440 = vadd.f32 0.0, %v439
  %v441 = vpop.f32.mrb[0].mxu0
  %442 = vmatprep.mubr.bf16.mxu0 0
  %443 = vmatmul.mubr.bf16.gmra.mrb[0].mxu0 %v235
  %v444 = vpop.f32.mrb[0].mxu0
  %v445 = vadd.f32 0.0, %v444
  %v446 = vpop.f32.mrb[0].mxu0
  %v447 = vpop.f32.mrb[0].mxu0
  %v448 = vadd.f32 0.0, %v447
  %v449 = vpop.f32.mrb[0].mxu0
  %450 = vmatprep.mubr.bf16.mxu0 0
  %451 = vmatmul.mubr.bf16.gmra.mrb[0].mxu0 %v236
  %v452 = vpop.f32.mrb[0].mxu0
  %v453 = vadd.f32 0.0, %v452
  %v454 = vpop.f32.mrb[0].mxu0
  %v455 = vpop.f32.mrb[0].mxu0
  %v456 = vadd.f32 0.0, %v455
  %v457 = vpop.f32.mrb[0].mxu0
  %458 = vmatprep.mubr.bf16.mxu0 0
  %459 = vmatmul.mubr.bf16.gmra.mrb[0].mxu0 %v237
  %v460 = vpop.f32.mrb[0].mxu0
  %v461 = vadd.f32 0.0, %v460
  %v462 = vpop.f32.mrb[0].mxu0
  %v463 = vpop.f32.mrb[0].mxu0
  %v464 = vadd.f32 0.0, %v463
  %v465 = vpop.f32.mrb[0].mxu0
  %466 = vmatprep.mubr.bf16.mxu0 0
  %467 = vmatmul.mubr.bf16.gmra.mrb[0].mxu0 %v238
  %v468 = vpop.f32.mrb[0].mxu0
  %v469 = vadd.f32 0.0, %v468
  %v470 = vpop.f32.mrb[0].mxu0
  %v471 = vpop.f32.mrb[0].mxu0
  %v472 = vadd.f32 0.0, %v471
  %v473 = vpop.f32.mrb[0].mxu0
  %474 = vmatprep.mubr.bf16.mxu0 0
  %475 = vmatmul.mubr.bf16.gmra.mrb[0].mxu0 %v239
  %v476 = vpop.f32.mrb[0].mxu0
  %v477 = vadd.f32 0.0, %v476
  %v478 = vpop.f32.mrb[0].mxu0
  %v479 = vpop.f32.mrb[0].mxu0
  %v480 = vadd.f32 0.0, %v479
  %v481 = vpop.f32.mrb[0].mxu0
  %482 = vmatprep.mubr.bf16.mxu0 0
  %483 = vmatmul.mubr.bf16.gmra.mrb[0].mxu0 %v240
  %v484 = vpop.f32.mrb[0].mxu0
  %v485 = vadd.f32 0.0, %v484
  %v486 = vpop.f32.mrb[0].mxu0
  %v487 = vpop.f32.mrb[0].mxu0
  %v488 = vadd.f32 0.0, %v487
  %v489 = vpop.f32.mrb[0].mxu0
  %490 = vmatprep.mubr.bf16.mxu0 0
  %491 = vmatmul.mubr.bf16.gmra.mrb[0].mxu0 %v241
  %v492 = vpop.f32.mrb[0].mxu0
  %v493 = vadd.f32 0.0, %v492
  %v494 = vpop.f32.mrb[0].mxu0
  %v495 = vpop.f32.mrb[0].mxu0
  %v496 = vadd.f32 0.0, %v495
  %v497 = vpop.f32.mrb[0].mxu0
  %498 = vmatprep.mubr.bf16.mxu0 0
  %499 = vmatmul.mubr.bf16.gmra.mrb[0].mxu0 %v242
  %v500 = vpop.f32.mrb[0].mxu0
  %v501 = vadd.f32 0.0, %v500
  %v502 = vpop.f32.mrb[0].mxu0
  %v503 = vpop.f32.mrb[0].mxu0
  %v504 = vadd.f32 0.0, %v503
  %v505 = vpop.f32.mrb[0].mxu0
  %506 = vmatprep.mubr.bf16.mxu0 0
  %507 = vmatmul.mubr.bf16.gmra.mrb[0].mxu0 %v243
  %v508 = vpop.f32.mrb[0].mxu0
  %v509 = vadd.f32 0.0, %v508
  %v510 = vpop.f32.mrb[0].mxu0
  %v511 = vpop.f32.mrb[0].mxu0
  %v512 = vadd.f32 0.0, %v511
  %v513 = vpop.f32.mrb[0].mxu0
  %514 = vmatprep.mubr.bf16.mxu0 0
  %515 = vmatmul.mubr.bf16.gmra.mrb[0].mxu0 %v244
  %v516 = vpop.f32.mrb[0].mxu0
  %v517 = vadd.f32 0.0, %v516
  %v518 = vpop.f32.mrb[0].mxu0
  %v519 = vpop.f32.mrb[0].mxu0
  %v520 = vadd.f32 0.0, %v519
  %v521 = vpop.f32.mrb[0].mxu0
  %522 = vmatprep.mubr.bf16.mxu0 0
  %523 = vmatmul.mubr.bf16.gmra.mrb[0].mxu0 %v245
  %v524 = vpop.f32.mrb[0].mxu0
  %v525 = vadd.f32 0.0, %v524
  %v526 = vpop.f32.mrb[0].mxu0
  %v527 = vpop.f32.mrb[0].mxu0
  %v528 = vadd.f32 0.0, %v527
  %v529 = vpop.f32.mrb[0].mxu0
  %530 = vmatprep.mubr.bf16.mxu0 0
  %531 = vmatmul.mubr.bf16.gmra.mrb[0].mxu0 %v246
  %v532 = vpop.f32.mrb[0].mxu0
  %v533 = vadd.f32 0.0, %v532
  %v534 = vpop.f32.mrb[0].mxu0
  %v535 = vpop.f32.mrb[0].mxu0
  %v536 = vadd.f32 0.0, %v535
  %v537 = vpop.f32.mrb[0].mxu0
  %538 = vmatprep.mubr.bf16.mxu0 0
  %539 = vmatmul.mubr.bf16.gmra.mrb[0].mxu0 %v247
  %v540 = vpop.f32.mrb[0].mxu0
  %v541 = vadd.f32 0.0, %v540
  %v542 = vpop.f32.mrb[0].mxu0
  %v543 = vpop.f32.mrb[0].mxu0
  %v544 = vadd.f32 0.0, %v543
  %v545 = vpop.f32.mrb[0].mxu0
  %546 = vmatprep.mubr.bf16.mxu0 0
  %547 = vmatmul.mubr.bf16.gmra.mrb[0].mxu0 %v248
  %v548 = vpop.f32.mrb[0].mxu0
  %v549 = vadd.f32 0.0, %v548
  %v550 = vpop.f32.mrb[0].mxu0
  %v551 = vpop.f32.mrb[0].mxu0
  %v552 = vadd.f32 0.0, %v551
  %v553 = vpop.f32.mrb[0].mxu0
  %554 = vmatprep.mubr.bf16.mxu0 0
  %555 = vmatmul.mubr.bf16.gmra.mrb[0].mxu0 %v249
  %v556 = vpop.f32.mrb[0].mxu0
  %v557 = vadd.f32 0.0, %v556
  %v558 = vpop.f32.mrb[0].mxu0
  %v559 = vpop.f32.mrb[0].mxu0
  %v560 = vadd.f32 0.0, %v559
  %v561 = vpop.f32.mrb[0].mxu0
  %562 = vmatprep.mubr.bf16.mxu0 0
  %563 = vmatmul.mubr.bf16.gmra.mrb[0].mxu0 %v250
  %v564 = vpop.f32.mrb[0].mxu0
  %v565 = vadd.f32 0.0, %v564
  %v566 = vpop.f32.mrb[0].mxu0
  %v567 = vpop.f32.mrb[0].mxu0
  %v568 = vadd.f32 0.0, %v567
  %v569 = vpop.f32.mrb[0].mxu0
  %570 = vmatprep.mubr.bf16.mxu0 0
  %571 = vmatmul.mubr.bf16.gmra.mrb[0].mxu0 %v251
  %v572 = vpop.f32.mrb[0].mxu0
  %v573 = vadd.f32 0.0, %v572
  %v574 = vpop.f32.mrb[0].mxu0
  %v575 = vpop.f32.mrb[0].mxu0
  %v576 = vadd.f32 0.0, %v575
  %v577 = vpop.f32.mrb[0].mxu0
  %578 = vmatprep.mubr.bf16.mxu0 0
  %579 = vmatmul.mubr.bf16.gmra.mrb[0].mxu0 %v252
  %v580 = vpop.f32.mrb[0].mxu0
  %v581 = vadd.f32 0.0, %v580
  %v582 = vpop.f32.mrb[0].mxu0
  %v583 = vpop.f32.mrb[0].mxu0
  %v584 = vadd.f32 0.0, %v583
  %v585 = vpop.f32.mrb[0].mxu0
  %586 = vmatprep.mubr.bf16.mxu0 0
  %587 = vmatmul.mubr.bf16.gmra.mrb[0].mxu0 %v253
  %v588 = vpop.f32.mrb[0].mxu0
  %v589 = vadd.f32 0.0, %v588
  %v590 = vpop.f32.mrb[0].mxu0
  %v591 = vpop.f32.mrb[0].mxu0
  %v592 = vadd.f32 0.0, %v591
  %v593 = vpop.f32.mrb[0].mxu0
  %594 = vmatprep.mubr.bf16.mxu0 0
  %595 = vmatmul.mubr.bf16.gmra.mrb[0].mxu0 %v254
  %v596 = vpop.f32.mrb[0].mxu0
  %v597 = vadd.f32 0.0, %v596
  %v598 = vpop.f32.mrb[0].mxu0
  %v599 = vpop.f32.mrb[0].mxu0
  %v600 = vadd.f32 0.0, %v599
  %v601 = vpop.f32.mrb[0].mxu0
  %602 = vmatprep.mubr.bf16.mxu0 0
  %603 = vmatmul.mubr.bf16.gmra.mrb[0].mxu0 %v255
  %v604 = vpop.f32.mrb[0].mxu0
  %v605 = vadd.f32 0.0, %v604
  %v606 = vpop.f32.mrb[0].mxu0
  %v607 = vpop.f32.mrb[0].mxu0
  %v608 = vadd.f32 0.0, %v607
  %v609 = vpop.f32.mrb[0].mxu0
  %610 = vmatprep.mubr.bf16.mxu0 0
  %611 = vmatmul.mubr.bf16.gmra.mrb[0].mxu0 %v256
  %v612 = vpop.f32.mrb[0].mxu0
  %v613 = vadd.f32 0.0, %v612
  %v614 = vpop.f32.mrb[0].mxu0
  %v615 = vpop.f32.mrb[0].mxu0
  %v616 = vadd.f32 0.0, %v615
  %v617 = vpop.f32.mrb[0].mxu0
  %618 = vmatprep.mubr.bf16.mxu0 0
  %619 = vmatmul.mubr.bf16.gmra.mrb[0].mxu0 %v257
  %v620 = vpop.f32.mrb[0].mxu0
  %v621 = vadd.f32 0.0, %v620
  %v622 = vpop.f32.mrb[0].mxu0
  %v623 = vpop.f32.mrb[0].mxu0
  %v624 = vadd.f32 0.0, %v623
  %v625 = vpop.f32.mrb[0].mxu0
  %626 = vdwg.mxu0
  %v627 = vld [vmem:[%s2] sm:$0x1]
  %v629 = vlaneseq
  %v630 = vshrl.u32 %v629, 7
  %v631 = vsub.s32 0, %v630
  %v632 = vrot.slane %v627, %v631
  %v634 = vmul.f32 %v373, %v632
  %v635 = vmul.f32 %v376, %v632
  %v636 = vmul.f32 %v381, %v632
  %v637 = vmul.f32 %v384, %v632
  %v638 = vmul.f32 %v389, %v632
  %v639 = vmul.f32 %v392, %v632
  %v640 = vmul.f32 %v397, %v632
  %v641 = vmul.f32 %v400, %v632
  %v642 = vmul.f32 %v405, %v632
  %v643 = vmul.f32 %v408, %v632
  %v644 = vmul.f32 %v413, %v632
  %v645 = vmul.f32 %v416, %v632
  %v646 = vmul.f32 %v421, %v632
  %v647 = vmul.f32 %v424, %v632
  %v648 = vmul.f32 %v429, %v632
  %v649 = vmul.f32 %v432, %v632
  %v650 = vmul.f32 %v437, %v632
  %v651 = vmul.f32 %v440, %v632
  %v652 = vmul.f32 %v445, %v632
  %v653 = vmul.f32 %v448, %v632
  %v654 = vmul.f32 %v453, %v632
  %v655 = vmul.f32 %v456, %v632
  %v656 = vmul.f32 %v461, %v632
  %v657 = vmul.f32 %v464, %v632
  %v658 = vmul.f32 %v469, %v632
  %v659 = vmul.f32 %v472, %v632
  %v660 = vmul.f32 %v477, %v632
  %v661 = vmul.f32 %v480, %v632
  %v662 = vmul.f32 %v485, %v632
  %v663 = vmul.f32 %v488, %v632
  %v664 = vmul.f32 %v493, %v632
  %v665 = vmul.f32 %v496, %v632
  %v666 = vmul.f32 %v501, %v632
  %v667 = vmul.f32 %v504, %v632
  %v668 = vmul.f32 %v509, %v632
  %v669 = vmul.f32 %v512, %v632
  %v670 = vmul.f32 %v517, %v632
  %v671 = vmul.f32 %v520, %v632
  %v672 = vmul.f32 %v525, %v632
  %v673 = vmul.f32 %v528, %v632
  %v674 = vmul.f32 %v533, %v632
  %v675 = vmul.f32 %v536, %v632
  %v676 = vmul.f32 %v541, %v632
  %v677 = vmul.f32 %v544, %v632
  %v678 = vmul.f32 %v549, %v632
  %v679 = vmul.f32 %v552, %v632
  %v680 = vmul.f32 %v557, %v632
  %v681 = vmul.f32 %v560, %v632
  %v682 = vmul.f32 %v565, %v632
  %v683 = vmul.f32 %v568, %v632
  %v684 = vmul.f32 %v573, %v632
  %v685 = vmul.f32 %v576, %v632
  %v686 = vmul.f32 %v581, %v632
  %v687 = vmul.f32 %v584, %v632
  %v688 = vmul.f32 %v589, %v632
  %v689 = vmul.f32 %v592, %v632
  %v690 = vmul.f32 %v597, %v632
  %v691 = vmul.f32 %v600, %v632
  %v692 = vmul.f32 %v605, %v632
  %v693 = vmul.f32 %v608, %v632
  %v694 = vmul.f32 %v613, %v632
  %v695 = vmul.f32 %v616, %v632
  %v696 = vmul.f32 %v621, %v632
  %v697 = vmul.f32 %v624, %v632
  %v698 = vld [vmem:[%s3] sm:$0x1]
  %v700 = vlaneseq
  %v701 = vshrl.u32 %v700, 7
  %v702 = vsub.s32 0, %v701
  %v703 = vrot.slane %v698, %v702
  %v705 = vadd.f32 %v634, %v703
  %v706 = vadd.f32 %v635, %v703
  %v707 = vadd.f32 %v636, %v703
  %v708 = vadd.f32 %v637, %v703
  %v709 = vadd.f32 %v638, %v703
  %v710 = vadd.f32 %v639, %v703
  %v711 = vadd.f32 %v640, %v703
  %v712 = vadd.f32 %v641, %v703
  %v713 = vadd.f32 %v642, %v703
  %v714 = vadd.f32 %v643, %v703
  %v715 = vadd.f32 %v644, %v703
  %v716 = vadd.f32 %v645, %v703
  %v717 = vadd.f32 %v646, %v703
  %v718 = vadd.f32 %v647, %v703
  %v719 = vadd.f32 %v648, %v703
  %v720 = vadd.f32 %v649, %v703
  %v721 = vadd.f32 %v650, %v703
  %v722 = vadd.f32 %v651, %v703
  %v723 = vadd.f32 %v652, %v703
  %v724 = vadd.f32 %v653, %v703
  %v725 = vadd.f32 %v654, %v703
  %v726 = vadd.f32 %v655, %v703
  %v727 = vadd.f32 %v656, %v703
  %v728 = vadd.f32 %v657, %v703
  %v729 = vadd.f32 %v658, %v703
  %v730 = vadd.f32 %v659, %v703
  %v731 = vadd.f32 %v660, %v703
  %v732 = vadd.f32 %v661, %v703
  %v733 = vadd.f32 %v662, %v703
  %v734 = vadd.f32 %v663, %v703
  %v735 = vadd.f32 %v664, %v703
  %v736 = vadd.f32 %v665, %v703
  %v737 = vadd.f32 %v666, %v703
  %v738 = vadd.f32 %v667, %v703
  %v739 = vadd.f32 %v668, %v703
  %v740 = vadd.f32 %v669, %v703
  %v741 = vadd.f32 %v670, %v703
  %v742 = vadd.f32 %v671, %v703
  %v743 = vadd.f32 %v672, %v703
  %v744 = vadd.f32 %v673, %v703
  %v745 = vadd.f32 %v674, %v703
  %v746 = vadd.f32 %v675, %v703
  %v747 = vadd.f32 %v676, %v703
  %v748 = vadd.f32 %v677, %v703
  %v749 = vadd.f32 %v678, %v703
  %v750 = vadd.f32 %v679, %v703
  %v751 = vadd.f32 %v680, %v703
  %v752 = vadd.f32 %v681, %v703
  %v753 = vadd.f32 %v682, %v703
  %v754 = vadd.f32 %v683, %v703
  %v755 = vadd.f32 %v684, %v703
  %v756 = vadd.f32 %v685, %v703
  %v757 = vadd.f32 %v686, %v703
  %v758 = vadd.f32 %v687, %v703
  %v759 = vadd.f32 %v688, %v703
  %v760 = vadd.f32 %v689, %v703
  %v761 = vadd.f32 %v690, %v703
  %v762 = vadd.f32 %v691, %v703
  %v763 = vadd.f32 %v692, %v703
  %v764 = vadd.f32 %v693, %v703
  %v765 = vadd.f32 %v694, %v703
  %v766 = vadd.f32 %v695, %v703
  %v767 = vadd.f32 %v696, %v703
  %v768 = vadd.f32 %v697, %v703
  %v769 = vmax.f32 %v705, 0.0
  %v770 = vmax.f32 %v706, 0.0
  %v771 = vmax.f32 %v707, 0.0
  %v772 = vmax.f32 %v708, 0.0
  %v773 = vmax.f32 %v709, 0.0
  %v774 = vmax.f32 %v710, 0.0
  %v775 = vmax.f32 %v711, 0.0
  %v776 = vmax.f32 %v712, 0.0
  %v777 = vmax.f32 %v713, 0.0
  %v778 = vmax.f32 %v714, 0.0
  %v779 = vmax.f32 %v715, 0.0
  %v780 = vmax.f32 %v716, 0.0
  %v781 = vmax.f32 %v717, 0.0
  %v782 = vmax.f32 %v718, 0.0
  %v783 = vmax.f32 %v719, 0.0
  %v784 = vmax.f32 %v720, 0.0
  %v785 = vmax.f32 %v721, 0.0
  %v786 = vmax.f32 %v722, 0.0
  %v787 = vmax.f32 %v723, 0.0
  %v788 = vmax.f32 %v724, 0.0
  %v789 = vmax.f32 %v725, 0.0
  %v790 = vmax.f32 %v726, 0.0
  %v791 = vmax.f32 %v727, 0.0
  %v792 = vmax.f32 %v728, 0.0
  %v793 = vmax.f32 %v729, 0.0
  %v794 = vmax.f32 %v730, 0.0
  %v795 = vmax.f32 %v731, 0.0
  %v796 = vmax.f32 %v732, 0.0
  %v797 = vmax.f32 %v733, 0.0
  %v798 = vmax.f32 %v734, 0.0
  %v799 = vmax.f32 %v735, 0.0
  %v800 = vmax.f32 %v736, 0.0
  %v801 = vmax.f32 %v737, 0.0
  %v802 = vmax.f32 %v738, 0.0
  %v803 = vmax.f32 %v739, 0.0
  %v804 = vmax.f32 %v740, 0.0
  %v805 = vmax.f32 %v741, 0.0
  %v806 = vmax.f32 %v742, 0.0
  %v807 = vmax.f32 %v743, 0.0
  %v808 = vmax.f32 %v744, 0.0
  %v809 = vmax.f32 %v745, 0.0
  %v810 = vmax.f32 %v746, 0.0
  %v811 = vmax.f32 %v747, 0.0
  %v812 = vmax.f32 %v748, 0.0
  %v813 = vmax.f32 %v749, 0.0
  %v814 = vmax.f32 %v750, 0.0
  %v815 = vmax.f32 %v751, 0.0
  %v816 = vmax.f32 %v752, 0.0
  %v817 = vmax.f32 %v753, 0.0
  %v818 = vmax.f32 %v754, 0.0
  %v819 = vmax.f32 %v755, 0.0
  %v820 = vmax.f32 %v756, 0.0
  %v821 = vmax.f32 %v757, 0.0
  %v822 = vmax.f32 %v758, 0.0
  %v823 = vmax.f32 %v759, 0.0
  %v824 = vmax.f32 %v760, 0.0
  %v825 = vmax.f32 %v761, 0.0
  %v826 = vmax.f32 %v762, 0.0
  %v827 = vmax.f32 %v763, 0.0
  %v828 = vmax.f32 %v764, 0.0
  %v829 = vmax.f32 %v765, 0.0
  %v830 = vmax.f32 %v766, 0.0
  %v831 = vmax.f32 %v767, 0.0
  %v832 = vmax.f32 %v768, 0.0
  %833 = vst [vmem:[%s4] sm:$0xff] %v769
  %834 = vst [vmem:[%s4 + $0x8] sm:$0xff] %v770
  %835 = vst [vmem:[%s4 + $0x10] sm:$0xff] %v771
  %836 = vst [vmem:[%s4 + $0x18] sm:$0xff] %v772
  %837 = vst [vmem:[%s4 + $0x20] sm:$0xff] %v773
  %838 = vst [vmem:[%s4 + $0x28] sm:$0xff] %v774
  %839 = vst [vmem:[%s4 + $0x30] sm:$0xff] %v775
  %840 = vst [vmem:[%s4 + $0x38] sm:$0xff] %v776
  %841 = vst [vmem:[%s4 + $0x40] sm:$0xff] %v777
  %842 = vst [vmem:[%s4 + $0x48] sm:$0xff] %v778
  %843 = vst [vmem:[%s4 + $0x50] sm:$0xff] %v779
  %844 = vst [vmem:[%s4 + $0x58] sm:$0xff] %v780
  %845 = vst [vmem:[%s4 + $0x60] sm:$0xff] %v781
  %846 = vst [vmem:[%s4 + $0x68] sm:$0xff] %v782
  %847 = vst [vmem:[%s4 + $0x70] sm:$0xff] %v783
  %848 = vst [vmem:[%s4 + $0x78] sm:$0xff] %v784
  %849 = vst [vmem:[%s4 + $0x80] sm:$0xff] %v785
  %850 = vst [vmem:[%s4 + $0x88] sm:$0xff] %v786
  %851 = vst [vmem:[%s4 + $0x90] sm:$0xff] %v787
  %852 = vst [vmem:[%s4 + $0x98] sm:$0xff] %v788
  %853 = vst [vmem:[%s4 + $0xa0] sm:$0xff] %v789
  %854 = vst [vmem:[%s4 + $0xa8] sm:$0xff] %v790
  %855 = vst [vmem:[%s4 + $0xb0] sm:$0xff] %v791
  %856 = vst [vmem:[%s4 + $0xb8] sm:$0xff] %v792
  %857 = vst [vmem:[%s4 + $0xc0] sm:$0xff] %v793
  %858 = vst [vmem:[%s4 + $0xc8] sm:$0xff] %v794
  %859 = vst [vmem:[%s4 + $0xd0] sm:$0xff] %v795
  %860 = vst [vmem:[%s4 + $0xd8] sm:$0xff] %v796
  %861 = vst [vmem:[%s4 + $0xe0] sm:$0xff] %v797
  %862 = vst [vmem:[%s4 + $0xe8] sm:$0xff] %v798
  %863 = vst [vmem:[%s4 + $0xf0] sm:$0xff] %v799
  %864 = vst [vmem:[%s4 + $0xf8] sm:$0xff] %v800
  %865 = vst [vmem:[%s4 + $0x100] sm:$0xff] %v801
  %866 = vst [vmem:[%s4 + $0x108] sm:$0xff] %v802
  %867 = vst [vmem:[%s4 + $0x110] sm:$0xff] %v803
  %868 = vst [vmem:[%s4 + $0x118] sm:$0xff] %v804
  %869 = vst [vmem:[%s4 + $0x120] sm:$0xff] %v805
  %870 = vst [vmem:[%s4 + $0x128] sm:$0xff] %v806
  %871 = vst [vmem:[%s4 + $0x130] sm:$0xff] %v807
  %872 = vst [vmem:[%s4 + $0x138] sm:$0xff] %v808
  %873 = vst [vmem:[%s4 + $0x140] sm:$0xff] %v809
  %874 = vst [vmem:[%s4 + $0x148] sm:$0xff] %v810
  %875 = vst [vmem:[%s4 + $0x150] sm:$0xff] %v811
  %876 = vst [vmem:[%s4 + $0x158] sm:$0xff] %v812
  %877 = vst [vmem:[%s4 + $0x160] sm:$0xff] %v813
  %878 = vst [vmem:[%s4 + $0x168] sm:$0xff] %v814
  %879 = vst [vmem:[%s4 + $0x170] sm:$0xff] %v815
  %880 = vst [vmem:[%s4 + $0x178] sm:$0xff] %v816
  %881 = vst [vmem:[%s4 + $0x180] sm:$0xff] %v817
  %882 = vst [vmem:[%s4 + $0x188] sm:$0xff] %v818
  %883 = vst [vmem:[%s4 + $0x190] sm:$0xff] %v819
  %884 = vst [vmem:[%s4 + $0x198] sm:$0xff] %v820
  %885 = vst [vmem:[%s4 + $0x1a0] sm:$0xff] %v821
  %886 = vst [vmem:[%s4 + $0x1a8] sm:$0xff] %v822
  %887 = vst [vmem:[%s4 + $0x1b0] sm:$0xff] %v823
  %888 = vst [vmem:[%s4 + $0x1b8] sm:$0xff] %v824
  %889 = vst [vmem:[%s4 + $0x1c0] sm:$0xff] %v825
  %890 = vst [vmem:[%s4 + $0x1c8] sm:$0xff] %v826
  %891 = vst [vmem:[%s4 + $0x1d0] sm:$0xff] %v827
  %892 = vst [vmem:[%s4 + $0x1d8] sm:$0xff] %v828
  %893 = vst [vmem:[%s4 + $0x1e0] sm:$0xff] %v829
  %894 = vst [vmem:[%s4 + $0x1e8] sm:$0xff] %v830
  %895 = vst [vmem:[%s4 + $0x1f0] sm:$0xff] %v831
  %896 = vst [vmem:[%s4 + $0x1f8] sm:$0xff] %v832
  // Predicated region
  $region18: #{block_forward.3} parent=0 // pred_check
    _
  $region19: #{block_forward.3} parent=0 // pred_check_branch
    %898 = sbr.rel (0) target = $region21
  $region20: #{block_forward.3} parent=0 // pred_region
    _
  $region21: #{block_forward.3} parent=0 // pred_fallthru
    _
  // Predicated region
  $region22: #{block_forward.3} parent=0 // pred_check
    _
  $region23: #{block_forward.3} parent=0 // pred_check_branch
    %900 = sbr.rel (0) target = $region25
  $region24: #{block_forward.3} parent=0 // pred_region
    _
  $region25: #{block_forward.3} parent=0 // pred_fallthru
    _

// kernel: block_forward.2
$region0: #{block_forward.2}
  #allocation0 [shape = 'u32[]', space=smem, size = 0x4, offset = 0x4, fixed_abs, tag = 'smem constant byte address 0x4 - core index']
  #allocation1 [shape = 'u32[144,128]{1,0:T(1,128)}', space=vmem, size = 0x12000, scoped, tag = 'internal scratch']
  %s0 = inlined_call_operand.vmem [shape: f32[2,18,18,128], index: 0, kind: input, shape index: {}]
  %s1 = inlined_call_operand.vmem [shape: f32[3,3,128], index: 1, kind: input, shape index: {}]
  %s2 = inlined_call_operand.vmem [shape: f32[1,128], index: 2, kind: input, shape index: {}]
  %s3 = inlined_call_operand.vmem [shape: f32[1,128], index: 3, kind: input, shape index: {}]
  %s4 = inlined_call_operand.vmem [shape: bf16[2,16,16,128], index: 4, kind: output, shape index: {}]
  %s5 = sld [smem:[#allocation0]]
  $region49: #{block_forward.2} parent=0
    _
  %s7 = ssub.s32 1, %s5
  %s8 = scalar_select 0, %s7, %s5
  loop: start=0, step=1, limit=4
  $region2: #{block_forward.2} parent=0 // loop_pre_header
    _
  $region3: #{block_forward.2} parent=0 // loop_header
    %s10 = sphi 0, %s14
    %p11 = scmp.ge.s32.totalorder %s10, 4
    %s17 = sphi 0, %s29
    %s18 = sphi 0, %s25
    %s19 = sphi 0, %s17
    %s20 = sphi 0, %s18
    %s21 = sphi 0, %s19
    %s22 = sphi 0, %s20
    %s34 = sphi 0, %s36
    %s37 = sphi 0, %s34
    %s38 = sphi 0, %s37
    %s54 = sphi 0, %s38
    %s60 = sphi 0, %s62
    %s63 = sphi 0, %s60
    %s64 = sphi 0, %s63
    %s80 = sphi 0, %s64
    %s86 = sphi 0, %s88
    %s89 = sphi 0, %s86
    %s90 = sphi 0, %s89
    %s106 = sphi 0, %s90
    %s112 = sphi 0, %s114
    %s115 = sphi 0, %s112
    %s116 = sphi 0, %s115
    %s132 = sphi 0, %s116
    %s140 = sphi 0, %s142
    %s143 = sphi 0, %s140
    %s144 = sphi 0, %s143
    %s160 = sphi 0, %s144
  $region4: #{block_forward.2} parent=0 // loop_header_branch
    %13 = sbr.rel (%p11) target = $region8
  $region5: #{block_forward.2} parent=0 // loop_body
    %s15 = ssub.s32 %s10, 1
    %s16 = ssub.s32 %s10, 2
    %s23 = sadd.s32 1, %s18
    %p24 = scmp.ge.s32.totalorder %s23, 1
    %s25 = scalar_select %p24, 0, %s23
    %s26 = sadd.s32 1, %s17
    %s27 = scalar_select %p24, %s26, %s17
    %p28 = scmp.ge.s32.totalorder %s27, 2
    %s29 = scalar_select %p28, 0, %s27
    %s30 = ssub.s32 %s17, %s29
    %s31 = ssub.s32 %s18, %s25
    %s32 = sor.u32 %s30, %s31
    %p33 = scmp.eq.s32.totalorder %s32, 0
    %s35 = sadd.s32 %s34, 1
    %s36 = scalar_select %p33, %s34, %s35
    %p39 = pneg %p33
    %p40 = scmp.eq.s32.totalorder %s10, 1
    %p41 = por %p39, %p40
    %p42 = scmp.ne.s32.totalorder %s34, %s37
    %p43 = scmp.eq.s32.totalorder %s10, 0
    %p44 = por %p42, %p43
    %p45 = scmp.ne.s32.totalorder %s34, %s37
    %p46 = scmp.eq.s32.totalorder %s15, 1
    %p47 = por %p45, %p46
    %p48 = scmp.ne.s32.totalorder %s37, %s38
    %p49 = scmp.eq.s32.totalorder %s15, 0
    %p50 = por %p48, %p49
    %p51 = scmp.ne.s32.totalorder %s37, %s38
    %p52 = scmp.eq.s32.totalorder %s16, 1
    %p53 = por %p51, %p52
    %p55 = scmp.ne.s32.totalorder %s38, %s54
    %p56 = scmp.eq.s32.totalorder %s16, 0
    %p57 = por %p55, %p56
    %s58 = ssub.s32 %s18, %s25
    %p59 = scmp.eq.s32.totalorder %s58, 0
    %s61 = sadd.s32 %s60, 1
    %s62 = scalar_select %p59, %s60, %s61
    %p65 = pneg %p59
    %p66 = scmp.eq.s32.totalorder %s10, 1
    %p67 = por %p65, %p66
    %p68 = scmp.ne.s32.totalorder %s60, %s63
    %p69 = scmp.eq.s32.totalorder %s10, 0
    %p70 = por %p68, %p69
    %p71 = scmp.ne.s32.totalorder %s60, %s63
    %p72 = scmp.eq.s32.totalorder %s15, 1
    %p73 = por %p71, %p72
    %p74 = scmp.ne.s32.totalorder %s63, %s64
    %p75 = scmp.eq.s32.totalorder %s15, 0
    %p76 = por %p74, %p75
    %p77 = scmp.ne.s32.totalorder %s63, %s64
    %p78 = scmp.eq.s32.totalorder %s16, 1
    %p79 = por %p77, %p78
    %p81 = scmp.ne.s32.totalorder %s64, %s80
    %p82 = scmp.eq.s32.totalorder %s16, 0
    %p83 = por %p81, %p82
    %s84 = ssub.s32 %s18, %s25
    %p85 = scmp.eq.s32.totalorder %s84, 0
    %s87 = sadd.s32 %s86, 1
    %s88 = scalar_select %p85, %s86, %s87
    %p91 = pneg %p85
    %p92 = scmp.eq.s32.totalorder %s10, 1
    %p93 = por %p91, %p92
    %p94 = scmp.ne.s32.totalorder %s86, %s89
    %p95 = scmp.eq.s32.totalorder %s10, 0
    %p96 = por %p94, %p95
    %p97 = scmp.ne.s32.totalorder %s86, %s89
    %p98 = scmp.eq.s32.totalorder %s15, 1
    %p99 = por %p97, %p98
    %p100 = scmp.ne.s32.totalorder %s89, %s90
    %p101 = scmp.eq.s32.totalorder %s15, 0
    %p102 = por %p100, %p101
    %p103 = scmp.ne.s32.totalorder %s89, %s90
    %p104 = scmp.eq.s32.totalorder %s16, 1
    %p105 = por %p103, %p104
    %p107 = scmp.ne.s32.totalorder %s90, %s106
    %p108 = scmp.eq.s32.totalorder %s16, 0
    %p109 = por %p107, %p108
    %s110 = ssub.s32 %s18, %s25
    %p111 = scmp.eq.s32.totalorder %s110, 0
    %s113 = sadd.s32 %s112, 1
    %s114 = scalar_select %p111, %s112, %s113
    %p117 = pneg %p111
    %p118 = scmp.eq.s32.totalorder %s10, 1
    %p119 = por %p117, %p118
    %p120 = scmp.ne.s32.totalorder %s112, %s115
    %p121 = scmp.eq.s32.totalorder %s10, 0
    %p122 = por %p120, %p121
    %p123 = scmp.ne.s32.totalorder %s112, %s115
    %p124 = scmp.eq.s32.totalorder %s15, 1
    %p125 = por %p123, %p124
    %p126 = scmp.ne.s32.totalorder %s115, %s116
    %p127 = scmp.eq.s32.totalorder %s15, 0
    %p128 = por %p126, %p127
    %p129 = scmp.ne.s32.totalorder %s115, %s116
    %p130 = scmp.eq.s32.totalorder %s16, 1
    %p131 = por %p129, %p130
    %p133 = scmp.ne.s32.totalorder %s116, %s132
    %p134 = scmp.eq.s32.totalorder %s16, 0
    %p135 = por %p133, %p134
    %s136 = ssub.s32 %s17, %s29
    %s137 = ssub.s32 %s18, %s25
    %s138 = sor.u32 %s136, %s137
    %p139 = scmp.eq.s32.totalorder %s138, 0
    %s141 = sadd.s32 %s140, 1
    %s142 = scalar_select %p139, %s140, %s141
    %p145 = pneg %p139
    %p146 = scmp.eq.s32.totalorder %s10, 1
    %p147 = por %p145, %p146
    %p148 = scmp.ne.s32.totalorder %s140, %s143
    %p149 = scmp.eq.s32.totalorder %s10, 0
    %p150 = por %p148, %p149
    %p151 = scmp.ne.s32.totalorder %s140, %s143
    %p152 = scmp.eq.s32.totalorder %s15, 1
    %p153 = por %p151, %p152
    %p154 = scmp.ne.s32.totalorder %s143, %s144
    %p155 = scmp.eq.s32.totalorder %s15, 0
    %p156 = por %p154, %p155
    %p157 = scmp.ne.s32.totalorder %s143, %s144
    %p158 = scmp.eq.s32.totalorder %s16, 1
    %p159 = por %p157, %p158
    %p161 = scmp.ne.s32.totalorder %s144, %s160
    %p162 = scmp.eq.s32.totalorder %s16, 0
    %p163 = por %p161, %p162
    %p164 = scmp.le.s32.totalorder 1, %s10
    %p165 = scmp.lt.s32.totalorder %s10, 3
    %p166 = pnand %p164, %p165
    %p167 = pneg %p166
    // Predicated region
    $region9: #{block_forward.2} parent=5 // pred_check
      _
    $region10: #{block_forward.2} parent=5 // pred_check_branch
      %169 = sbr.rel (%p166) target = $region12
    $region11: #{block_forward.2} parent=5 // pred_region
      %s170 = ssub.s32 %s10, 1
      // Predicated region
      $region13: #{block_forward.2} parent=11 // pred_check
        %p171 = pneg %p76
      $region14: #{block_forward.2} parent=11 // pred_check_branch
        %173 = sbr.rel (%p171) target = $region16
      $region15: #{block_forward.2} parent=11 // pred_region
        %p174 = scmp.lt.s32.totalorder %s20, 0
        %s175 = scalar_select %p174, %s20, 0
        %s176 = smul.addr %s175, 4
        %s177 = scalar_lea.vmem %s1, %s176
      $region16: #{block_forward.2} parent=11 // pred_fallthru
        _
      // Predicated region
      $region17: #{block_forward.2} parent=11 // pred_check
        %p178 = pneg %p102
      $region18: #{block_forward.2} parent=11 // pred_check_branch
        %180 = sbr.rel (%p178) target = $region20
      $region19: #{block_forward.2} parent=11 // pred_region
        %p181 = scmp.lt.s32.totalorder %s20, 0
        %s182 = scalar_select %p181, %s20, 0
        %s183 = scalar_lea.vmem %s2, %s182
      $region20: #{block_forward.2} parent=11 // pred_fallthru
        _
      // Predicated region
      $region21: #{block_forward.2} parent=11 // pred_check
        %p184 = pneg %p128
      $region22: #{block_forward.2} parent=11 // pred_check_branch
        %186 = sbr.rel (%p184) target = $region24
      $region23: #{block_forward.2} parent=11 // pred_region
        %p187 = scmp.lt.s32.totalorder %s20, 0
        %s188 = scalar_select %p187, %s20, 0
        %s189 = scalar_lea.vmem %s3, %s188
      $region24: #{block_forward.2} parent=11 // pred_fallthru
        _
    $region12: #{block_forward.2} parent=5 // pred_fallthru
      _
    %p190 = scmp.lt.s32.totalorder %s10, 2
    // Predicated region
    $region25: #{block_forward.2} parent=5 // pred_check
      %p191 = pneg %p190
    $region26: #{block_forward.2} parent=5 // pred_check_branch
      %193 = sbr.rel (%p191) target = $region28
    $region27: #{block_forward.2} parent=5 // pred_region
      // Predicated region
      $region29: #{block_forward.2} parent=27 // pred_check
        %p194 = pneg %p44
      $region30: #{block_forward.2} parent=27 // pred_check_branch
        %196 = sbr.rel (%p194) target = $region32
      $region31: #{block_forward.2} parent=27 // pred_region
        %p197 = scmp.lt.s32.totalorder %s17, 1
        %s198 = scalar_select %p197, %s17, 1
        %p199 = scmp.lt.s32.totalorder %s18, 0
        %s200 = scalar_select %p199, %s18, 0
        %s201 = smul.addr %s198, 54
        %s202 = sadd.s32 %s200, %s201
        %s203 = smul.addr %s202, 8
        %s204 = scalar_lea.vmem %s0, %s203
      $region32: #{block_forward.2} parent=27 // pred_fallthru
        _
    $region28: #{block_forward.2} parent=5 // pred_fallthru
      _
    %p205 = scmp.le.s32.totalorder 1, %s10
    %p206 = scmp.lt.s32.totalorder %s10, 3
    %p207 = pnand %p205, %p206
    %p208 = pneg %p207
    // Predicated region
    $region33: #{block_forward.2} parent=5 // pred_check
      _
    $region34: #{block_forward.2} parent=5 // pred_check_branch
      %210 = sbr.rel (%p207) target = $region36
    $region35: #{block_forward.2} parent=5 // pred_region
      %s211 = ssub.s32 %s10, 1
      %p212 = scmp.lt.s32.totalorder %s19, 1
      %s213 = scalar_select %p212, %s19, 1
      %p214 = scmp.lt.s32.totalorder %s20, 0
      %s215 = scalar_select %p214, %s20, 0
      %s216 = smul.addr %s213, 54
      %s217 = sadd.s32 %s215, %s216
      %s218 = smul.addr %s217, 8
      %s219 = scalar_lea.vmem %s0, %s218
      %p220 = pneg %p50
      %p221 = pneg %p47
      %p222 = scmp.lt.s32.totalorder %s20, 0
      %s223 = scalar_select %p222, %s20, 0
      %s224 = smul.addr %s223, 4
      %s225 = scalar_lea.vmem %s1, %s224
      %p226 = pneg %p76
      %p227 = pneg %p73
      %p228 = scmp.lt.s32.totalorder %s20, 0
      %s229 = scalar_select %p228, %s20, 0
      %s230 = scalar_lea.vmem %s2, %s229
      %p231 = pneg %p102
      %p232 = pneg %p99
      %p233 = scmp.lt.s32.totalorder %s20, 0
      %s234 = scalar_select %p233, %s20, 0
      %s235 = scalar_lea.vmem %s3, %s234
      %p236 = pneg %p128
      %p237 = pneg %p125
      %p238 = pneg %p156
      %p239 = pneg %p153
      %p240 = scmp.lt.s32.totalorder %s19, 1
      %s241 = scalar_select %p240, %s19, 1
      %p242 = scmp.lt.s32.totalorder %s20, 0
      %s243 = scalar_select %p242, %s20, 0
      %s244 = smul.addr %s241, 32
      %s245 = sadd.s32 %s243, %s244
      %s246 = smul.addr %s245, 4
      %s247 = scalar_lea.vmem %s4, %s246
      %p248 = scmp.lt.s32.totalorder %s19, 1
      %s249 = scalar_select %p248, %s19, 1
      %p250 = scmp.lt.s32.totalorder %s20, 0
      %s251 = scalar_select %p250, %s20, 0
      %s252 = smul.addr %s249, 54
      %s253 = sadd.s32 %s251, %s252
      %s254 = smul.addr %s253, 8
      %s255 = scalar_lea.vmem %s0, %s254
      %p256 = scmp.lt.s32.totalorder %s20, 0
      %s257 = scalar_select %p256, %s20, 0
      %s258 = smul.addr %s257, 4
      %s259 = scalar_lea.vmem %s1, %s258
      %p260 = scmp.lt.s32.totalorder %s20, 0
      %s261 = scalar_select %p260, %s20, 0
      %s262 = scalar_lea.vmem %s2, %s261
      %p263 = scmp.lt.s32.totalorder %s20, 0
      %s264 = scalar_select %p263, %s20, 0
      %s265 = scalar_lea.vmem %s3, %s264
      %p266 = scmp.lt.s32.totalorder %s19, 1
      %s267 = scalar_select %p266, %s19, 1
      %p268 = scmp.lt.s32.totalorder %s20, 0
      %s269 = scalar_select %p268, %s20, 0
      %s270 = smul.addr %s267, 32
      %s271 = sadd.s32 %s269, %s270
      %s272 = smul.addr %s271, 4
      %s273 = scalar_lea.vmem %s4, %s272
      %v274 = vld [vmem:[%s255] sm:$0xff]
      %v275 = vld [vmem:[%s255 + $0x8] sm:$0xff]
      %v276 = vld [vmem:[%s255 + $0x18] sm:$0xff]
      %v277 = vld [vmem:[%s255 + $0x20] sm:$0xff]
      %v278 = vld [vmem:[%s255 + $0x30] sm:$0xff]
      %v279 = vld [vmem:[%s255 + $0x38] sm:$0xff]
      %v280 = vld [vmem:[%s255 + $0x48] sm:$0xff]
      %v281 = vld [vmem:[%s255 + $0x50] sm:$0xff]
      %v282 = vld [vmem:[%s255 + $0x60] sm:$0xff]
      %v283 = vld [vmem:[%s255 + $0x68] sm:$0xff]
      %v284 = vld [vmem:[%s255 + $0x78] sm:$0xff]
      %v285 = vld [vmem:[%s255 + $0x80] sm:$0xff]
      %v286 = vld [vmem:[%s255 + $0x90] sm:$0xff]
      %v287 = vld [vmem:[%s255 + $0x98] sm:$0xff]
      %v288 = vld [vmem:[%s255 + $0xa8] sm:$0xff]
      %v289 = vld [vmem:[%s255 + $0xb0] sm:$0xff]
      %v290 = vld [vmem:[%s255 + $0xc0] sm:$0xff]
      %v291 = vld [vmem:[%s255 + $0xc8] sm:$0xff]
      %v292 = vld [vmem:[%s255 + $0xd8] sm:$0xff]
      %v293 = vld [vmem:[%s255 + $0xe0] sm:$0xff]
      %v294 = vld [vmem:[%s255 + $0xf0] sm:$0xff]
      %v295 = vld [vmem:[%s255 + $0xf8] sm:$0xff]
      %v296 = vld [vmem:[%s255 + $0x108] sm:$0xff]
      %v297 = vld [vmem:[%s255 + $0x110] sm:$0xff]
      %v298 = vld [vmem:[%s255 + $0x120] sm:$0xff]
      %v299 = vld [vmem:[%s255 + $0x128] sm:$0xff]
      %v300 = vld [vmem:[%s255 + $0x138] sm:$0xff]
      %v301 = vld [vmem:[%s255 + $0x140] sm:$0xff]
      %v302 = vld [vmem:[%s255 + $0x150] sm:$0xff]
      %v303 = vld [vmem:[%s255 + $0x158] sm:$0xff]
      %v304 = vld [vmem:[%s255 + $0x168] sm:$0xff]
      %v305 = vld [vmem:[%s255 + $0x170] sm:$0xff]
      %v306 = vld [vmem:[%s259] sm:$0x1]
      %v307 = vlaneseq
      %v308 = vshrl.u32 %v307, 7
      %v309 = vsub.s32 0, %v308
      %v310 = vrot.slane %v306, %v309
      %v311 = vmul.f32 %v274, %v310
      %v312 = vmul.f32 %v275, %v310
      %v313 = vmul.f32 %v276, %v310
      %v314 = vmul.f32 %v277, %v310
      %v315 = vmul.f32 %v278, %v310
      %v316 = vmul.f32 %v279, %v310
      %v317 = vmul.f32 %v280, %v310
      %v318 = vmul.f32 %v281, %v310
      %v319 = vmul.f32 %v282, %v310
      %v320 = vmul.f32 %v283, %v310
      %v321 = vmul.f32 %v284, %v310
      %v322 = vmul.f32 %v285, %v310
      %v323 = vmul.f32 %v286, %v310
      %v324 = vmul.f32 %v287, %v310
      %v325 = vmul.f32 %v288, %v310
      %v326 = vmul.f32 %v289, %v310
      %v327 = vmul.f32 %v290, %v310
      %v328 = vmul.f32 %v291, %v310
      %v329 = vmul.f32 %v292, %v310
      %v330 = vmul.f32 %v293, %v310
      %v331 = vmul.f32 %v294, %v310
      %v332 = vmul.f32 %v295, %v310
      %v333 = vmul.f32 %v296, %v310
      %v334 = vmul.f32 %v297, %v310
      %v335 = vmul.f32 %v298, %v310
      %v336 = vmul.f32 %v299, %v310
      %v337 = vmul.f32 %v300, %v310
      %v338 = vmul.f32 %v301, %v310
      %v339 = vmul.f32 %v302, %v310
      %v340 = vmul.f32 %v303, %v310
      %v341 = vmul.f32 %v304, %v310
      %v342 = vmul.f32 %v305, %v310
      %v343 = vadd.f32 %v311, 0.0
      %v344 = vadd.f32 %v312, 0.0
      %v345 = vadd.f32 %v313, 0.0
      %v346 = vadd.f32 %v314, 0.0
      %v347 = vadd.f32 %v315, 0.0
      %v348 = vadd.f32 %v316, 0.0
      %v349 = vadd.f32 %v317, 0.0
      %v350 = vadd.f32 %v318, 0.0
      %v351 = vadd.f32 %v319, 0.0
      %v352 = vadd.f32 %v320, 0.0
      %v353 = vadd.f32 %v321, 0.0
      %v354 = vadd.f32 %v322, 0.0
      %v355 = vadd.f32 %v323, 0.0
      %v356 = vadd.f32 %v324, 0.0
      %v357 = vadd.f32 %v325, 0.0
      %v358 = vadd.f32 %v326, 0.0
      %v359 = vadd.f32 %v327, 0.0
      %v360 = vadd.f32 %v328, 0.0
      %v361 = vadd.f32 %v329, 0.0
      %v362 = vadd.f32 %v330, 0.0
      %v363 = vadd.f32 %v331, 0.0
      %v364 = vadd.f32 %v332, 0.0
      %v365 = vadd.f32 %v333, 0.0
      %v366 = vadd.f32 %v334, 0.0
      %v367 = vadd.f32 %v335, 0.0
      %v368 = vadd.f32 %v336, 0.0
      %v369 = vadd.f32 %v337, 0.0
      %v370 = vadd.f32 %v338, 0.0
      %v371 = vadd.f32 %v339, 0.0
      %v372 = vadd.f32 %v340, 0.0
      %v373 = vadd.f32 %v341, 0.0
      %v374 = vadd.f32 %v342, 0.0
      %v375 = vld [vmem:[%s255 + $0x1] sm:$0xff]
      %v376 = vld [vmem:[%s255 + $0x9] sm:$0xff]
      %v377 = vld [vmem:[%s255 + $0x19] sm:$0xff]
      %v378 = vld [vmem:[%s255 + $0x21] sm:$0xff]
      %v379 = vld [vmem:[%s255 + $0x31] sm:$0xff]
      %v380 = vld [vmem:[%s255 + $0x39] sm:$0xff]
      %v381 = vld [vmem:[%s255 + $0x49] sm:$0xff]
      %v382 = vld [vmem:[%s255 + $0x51] sm:$0xff]
      %v383 = vld [vmem:[%s255 + $0x61] sm:$0xff]
      %v384 = vld [vmem:[%s255 + $0x69] sm:$0xff]
      %v385 = vld [vmem:[%s255 + $0x79] sm:$0xff]
      %v386 = vld [vmem:[%s255 + $0x81] sm:$0xff]
      %v387 = vld [vmem:[%s255 + $0x91] sm:$0xff]
      %v388 = vld [vmem:[%s255 + $0x99] sm:$0xff]
      %v389 = vld [vmem:[%s255 + $0xa9] sm:$0xff]
      %v390 = vld [vmem:[%s255 + $0xb1] sm:$0xff]
      %v391 = vld [vmem:[%s255 + $0xc1] sm:$0xff]
      %v392 = vld [vmem:[%s255 + $0xc9] sm:$0xff]
      %v393 = vld [vmem:[%s255 + $0xd9] sm:$0xff]
      %v394 = vld [vmem:[%s255 + $0xe1] sm:$0xff]
      %v395 = vld [vmem:[%s255 + $0xf1] sm:$0xff]
      %v396 = vld [vmem:[%s255 + $0xf9] sm:$0xff]
      %v397 = vld [vmem:[%s255 + $0x109] sm:$0xff]
      %v398 = vld [vmem:[%s255 + $0x111] sm:$0xff]
      %v399 = vld [vmem:[%s255 + $0x121] sm:$0xff]
      %v400 = vld [vmem:[%s255 + $0x129] sm:$0xff]
      %v401 = vld [vmem:[%s255 + $0x139] sm:$0xff]
      %v402 = vld [vmem:[%s255 + $0x141] sm:$0xff]
      %v403 = vld [vmem:[%s255 + $0x151] sm:$0xff]
      %v404 = vld [vmem:[%s255 + $0x159] sm:$0xff]
      %v405 = vld [vmem:[%s255 + $0x169] sm:$0xff]
      %v406 = vld [vmem:[%s255 + $0x171] sm:$0xff]
      %v407 = vld [vmem:[%s259 + $0x1] sm:$0x1]
      %v408 = vlaneseq
      %v409 = vshrl.u32 %v408, 7
      %v410 = vsub.s32 0, %v409
      %v411 = vrot.slane %v407, %v410
      %v412 = vmul.f32 %v375, %v411
      %v413 = vmul.f32 %v376, %v411
      %v414 = vmul.f32 %v377, %v411
      %v415 = vmul.f32 %v378, %v411
      %v416 = vmul.f32 %v379, %v411
      %v417 = vmul.f32 %v380, %v411
      %v418 = vmul.f32 %v381, %v411
      %v419 = vmul.f32 %v382, %v411
      %v420 = vmul.f32 %v383, %v411
      %v421 = vmul.f32 %v384, %v411
      %v422 = vmul.f32 %v385, %v411
      %v423 = vmul.f32 %v386, %v411
      %v424 = vmul.f32 %v387, %v411
      %v425 = vmul.f32 %v388, %v411
      %v426 = vmul.f32 %v389, %v411
      %v427 = vmul.f32 %v390, %v411
      %v428 = vmul.f32 %v391, %v411
      %v429 = vmul.f32 %v392, %v411
      %v430 = vmul.f32 %v393, %v411
      %v431 = vmul.f32 %v394, %v411
      %v432 = vmul.f32 %v395, %v411
      %v433 = vmul.f32 %v396, %v411
      %v434 = vmul.f32 %v397, %v411
      %v435 = vmul.f32 %v398, %v411
      %v436 = vmul.f32 %v399, %v411
      %v437 = vmul.f32 %v400, %v411
      %v438 = vmul.f32 %v401, %v411
      %v439 = vmul.f32 %v402, %v411
      %v440 = vmul.f32 %v403, %v411
      %v441 = vmul.f32 %v404, %v411
      %v442 = vmul.f32 %v405, %v411
      %v443 = vmul.f32 %v406, %v411
      %v444 = vadd.f32 %v343, %v412
      %v445 = vadd.f32 %v344, %v413
      %v446 = vadd.f32 %v345, %v414
      %v447 = vadd.f32 %v346, %v415
      %v448 = vadd.f32 %v347, %v416
      %v449 = vadd.f32 %v348, %v417
      %v450 = vadd.f32 %v349, %v418
      %v451 = vadd.f32 %v350, %v419
      %v452 = vadd.f32 %v351, %v420
      %v453 = vadd.f32 %v352, %v421
      %v454 = vadd.f32 %v353, %v422
      %v455 = vadd.f32 %v354, %v423
      %v456 = vadd.f32 %v355, %v424
      %v457 = vadd.f32 %v356, %v425
      %v458 = vadd.f32 %v357, %v426
      %v459 = vadd.f32 %v358, %v427
      %v460 = vadd.f32 %v359, %v428
      %v461 = vadd.f32 %v360, %v429
      %v462 = vadd.f32 %v361, %v430
      %v463 = vadd.f32 %v362, %v431
      %v464 = vadd.f32 %v363, %v432
      %v465 = vadd.f32 %v364, %v433
      %v466 = vadd.f32 %v365, %v434
      %v467 = vadd.f32 %v366, %v435
      %v468 = vadd.f32 %v367, %v436
      %v469 = vadd.f32 %v368, %v437
      %v470 = vadd.f32 %v369, %v438
      %v471 = vadd.f32 %v370, %v439
      %v472 = vadd.f32 %v371, %v440
      %v473 = vadd.f32 %v372, %v441
      %v474 = vadd.f32 %v373, %v442
      %v475 = vadd.f32 %v374, %v443
      %v476 = vld [vmem:[%s255 + $0x2] sm:$0xff]
      %v477 = vld [vmem:[%s255 + $0xa] sm:$0xff]
      %v478 = vld [vmem:[%s255 + $0x1a] sm:$0xff]
      %v479 = vld [vmem:[%s255 + $0x22] sm:$0xff]
      %v480 = vld [vmem:[%s255 + $0x32] sm:$0xff]
      %v481 = vld [vmem:[%s255 + $0x3a] sm:$0xff]
      %v482 = vld [vmem:[%s255 + $0x4a] sm:$0xff]
      %v483 = vld [vmem:[%s255 + $0x52] sm:$0xff]
      %v484 = vld [vmem:[%s255 + $0x62] sm:$0xff]
      %v485 = vld [vmem:[%s255 + $0x6a] sm:$0xff]
      %v486 = vld [vmem:[%s255 + $0x7a] sm:$0xff]
      %v487 = vld [vmem:[%s255 + $0x82] sm:$0xff]
      %v488 = vld [vmem:[%s255 + $0x92] sm:$0xff]
      %v489 = vld [vmem:[%s255 + $0x9a] sm:$0xff]
      %v490 = vld [vmem:[%s255 + $0xaa] sm:$0xff]
      %v491 = vld [vmem:[%s255 + $0xb2] sm:$0xff]
      %v492 = vld [vmem:[%s255 + $0xc2] sm:$0xff]
      %v493 = vld [vmem:[%s255 + $0xca] sm:$0xff]
      %v494 = vld [vmem:[%s255 + $0xda] sm:$0xff]
      %v495 = vld [vmem:[%s255 + $0xe2] sm:$0xff]
      %v496 = vld [vmem:[%s255 + $0xf2] sm:$0xff]
      %v497 = vld [vmem:[%s255 + $0xfa] sm:$0xff]
      %v498 = vld [vmem:[%s255 + $0x10a] sm:$0xff]
      %v499 = vld [vmem:[%s255 + $0x112] sm:$0xff]
      %v500 = vld [vmem:[%s255 + $0x122] sm:$0xff]
      %v501 = vld [vmem:[%s255 + $0x12a] sm:$0xff]
      %v502 = vld [vmem:[%s255 + $0x13a] sm:$0xff]
      %v503 = vld [vmem:[%s255 + $0x142] sm:$0xff]
      %v504 = vld [vmem:[%s255 + $0x152] sm:$0xff]
      %v505 = vld [vmem:[%s255 + $0x15a] sm:$0xff]
      %v506 = vld [vmem:[%s255 + $0x16a] sm:$0xff]
      %v507 = vld [vmem:[%s255 + $0x172] sm:$0xff]
      %v508 = vld [vmem:[%s259 + $0x2] sm:$0x1]
      %v509 = vlaneseq
      %v510 = vshrl.u32 %v509, 7
      %v511 = vsub.s32 0, %v510
      %v512 = vrot.slane %v508, %v511
      %v513 = vmul.f32 %v476, %v512
      %v514 = vmul.f32 %v477, %v512
      %v515 = vmul.f32 %v478, %v512
      %v516 = vmul.f32 %v479, %v512
      %v517 = vmul.f32 %v480, %v512
      %v518 = vmul.f32 %v481, %v512
      %v519 = vmul.f32 %v482, %v512
      %v520 = vmul.f32 %v483, %v512
      %v521 = vmul.f32 %v484, %v512
      %v522 = vmul.f32 %v485, %v512
      %v523 = vmul.f32 %v486, %v512
      %v524 = vmul.f32 %v487, %v512
      %v525 = vmul.f32 %v488, %v512
      %v526 = vmul.f32 %v489, %v512
      %v527 = vmul.f32 %v490, %v512
      %v528 = vmul.f32 %v491, %v512
      %v529 = vmul.f32 %v492, %v512
      %v530 = vmul.f32 %v493, %v512
      %v531 = vmul.f32 %v494, %v512
      %v532 = vmul.f32 %v495, %v512
      %v533 = vmul.f32 %v496, %v512
      %v534 = vmul.f32 %v497, %v512
      %v535 = vmul.f32 %v498, %v512
      %v536 = vmul.f32 %v499, %v512
      %v537 = vmul.f32 %v500, %v512
      %v538 = vmul.f32 %v501, %v512
      %v539 = vmul.f32 %v502, %v512
      %v540 = vmul.f32 %v503, %v512
      %v541 = vmul.f32 %v504, %v512
      %v542 = vmul.f32 %v505, %v512
      %v543 = vmul.f32 %v506, %v512
      %v544 = vmul.f32 %v507, %v512
      %v545 = vadd.f32 %v444, %v513
      %v546 = vadd.f32 %v445, %v514
      %v547 = vadd.f32 %v446, %v515
      %v548 = vadd.f32 %v447, %v516
      %v549 = vadd.f32 %v448, %v517
      %v550 = vadd.f32 %v449, %v518
      %v551 = vadd.f32 %v450, %v519
      %v552 = vadd.f32 %v451, %v520
      %v553 = vadd.f32 %v452, %v521
      %v554 = vadd.f32 %v453, %v522
      %v555 = vadd.f32 %v454, %v523
      %v556 = vadd.f32 %v455, %v524
      %v557 = vadd.f32 %v456, %v525
      %v558 = vadd.f32 %v457, %v526
      %v559 = vadd.f32 %v458, %v527
      %v560 = vadd.f32 %v459, %v528
      %v561 = vadd.f32 %v460, %v529
      %v562 = vadd.f32 %v461, %v530
      %v563 = vadd.f32 %v462, %v531
      %v564 = vadd.f32 %v463, %v532
      %v565 = vadd.f32 %v464, %v533
      %v566 = vadd.f32 %v465, %v534
      %v567 = vadd.f32 %v466, %v535
      %v568 = vadd.f32 %v467, %v536
      %v569 = vadd.f32 %v468, %v537
      %v570 = vadd.f32 %v469, %v538
      %v571 = vadd.f32 %v470, %v539
      %v572 = vadd.f32 %v471, %v540
      %v573 = vadd.f32 %v472, %v541
      %v574 = vadd.f32 %v473, %v542
      %v575 = vadd.f32 %v474, %v543
      %v576 = vadd.f32 %v475, %v544
      %s577 = scalar_lea.vmem %s255, 24
      %v578 = vld [vmem:[%s577] sm:$0xff]
      %v579 = vld [vmem:[%s577 + $0x8] sm:$0xff]
      %v580 = vld [vmem:[%s577 + $0x18] sm:$0xff]
      %v581 = vld [vmem:[%s577 + $0x20] sm:$0xff]
      %v582 = vld [vmem:[%s577 + $0x30] sm:$0xff]
      %v583 = vld [vmem:[%s577 + $0x38] sm:$0xff]
      %v584 = vld [vmem:[%s577 + $0x48] sm:$0xff]
      %v585 = vld [vmem:[%s577 + $0x50] sm:$0xff]
      %v586 = vld [vmem:[%s577 + $0x60] sm:$0xff]
      %v587 = vld [vmem:[%s577 + $0x68] sm:$0xff]
      %v588 = vld [vmem:[%s577 + $0x78] sm:$0xff]
      %v589 = vld [vmem:[%s577 + $0x80] sm:$0xff]
      %v590 = vld [vmem:[%s577 + $0x90] sm:$0xff]
      %v591 = vld [vmem:[%s577 + $0x98] sm:$0xff]
      %v592 = vld [vmem:[%s577 + $0xa8] sm:$0xff]
      %v593 = vld [vmem:[%s577 + $0xb0] sm:$0xff]
      %v594 = vld [vmem:[%s577 + $0xc0] sm:$0xff]
      %v595 = vld [vmem:[%s577 + $0xc8] sm:$0xff]
      %v596 = vld [vmem:[%s577 + $0xd8] sm:$0xff]
      %v597 = vld [vmem:[%s577 + $0xe0] sm:$0xff]
      %v598 = vld [vmem:[%s577 + $0xf0] sm:$0xff]
      %v599 = vld [vmem:[%s577 + $0xf8] sm:$0xff]
      %v600 = vld [vmem:[%s577 + $0x108] sm:$0xff]
      %v601 = vld [vmem:[%s577 + $0x110] sm:$0xff]
      %v602 = vld [vmem:[%s577 + $0x120] sm:$0xff]
      %v603 = vld [vmem:[%s577 + $0x128] sm:$0xff]
      %v604 = vld [vmem:[%s577 + $0x138] sm:$0xff]
      %v605 = vld [vmem:[%s577 + $0x140] sm:$0xff]
      %v606 = vld [vmem:[%s577 + $0x150] sm:$0xff]
      %v607 = vld [vmem:[%s577 + $0x158] sm:$0xff]
      %v608 = vld [vmem:[%s577 + $0x168] sm:$0xff]
      %v609 = vld [vmem:[%s577 + $0x170] sm:$0xff]
      %s610 = scalar_lea.vmem %s259, 4
      %v611 = vld [vmem:[%s610] sm:$0x1]
      %v612 = vlaneseq
      %v613 = vshrl.u32 %v612, 7
      %v614 = vsub.s32 0, %v613
      %v615 = vrot.slane %v611, %v614
      %v616 = vmul.f32 %v578, %v615
      %v617 = vmul.f32 %v579, %v615
      %v618 = vmul.f32 %v580, %v615
      %v619 = vmul.f32 %v581, %v615
      %v620 = vmul.f32 %v582, %v615
      %v621 = vmul.f32 %v583, %v615
      %v622 = vmul.f32 %v584, %v615
      %v623 = vmul.f32 %v585, %v615
      %v624 = vmul.f32 %v586, %v615
      %v625 = vmul.f32 %v587, %v615
      %v626 = vmul.f32 %v588, %v615
      %v627 = vmul.f32 %v589, %v615
      %v628 = vmul.f32 %v590, %v615
      %v629 = vmul.f32 %v591, %v615
      %v630 = vmul.f32 %v592, %v615
      %v631 = vmul.f32 %v593, %v615
      %v632 = vmul.f32 %v594, %v615
      %v633 = vmul.f32 %v595, %v615
      %v634 = vmul.f32 %v596, %v615
      %v635 = vmul.f32 %v597, %v615
      %v636 = vmul.f32 %v598, %v615
      %v637 = vmul.f32 %v599, %v615
      %v638 = vmul.f32 %v600, %v615
      %v639 = vmul.f32 %v601, %v615
      %v640 = vmul.f32 %v602, %v615
      %v641 = vmul.f32 %v603, %v615
      %v642 = vmul.f32 %v604, %v615
      %v643 = vmul.f32 %v605, %v615
      %v644 = vmul.f32 %v606, %v615
      %v645 = vmul.f32 %v607, %v615
      %v646 = vmul.f32 %v608, %v615
      %v647 = vmul.f32 %v609, %v615
      %v648 = vadd.f32 %v545, %v616
      %v649 = vadd.f32 %v546, %v617
      %v650 = vadd.f32 %v547, %v618
      %v651 = vadd.f32 %v548, %v619
      %v652 = vadd.f32 %v549, %v620
      %v653 = vadd.f32 %v550, %v621
      %v654 = vadd.f32 %v551, %v622
      %v655 = vadd.f32 %v552, %v623
      %v656 = vadd.f32 %v553, %v624
      %v657 = vadd.f32 %v554, %v625
      %v658 = vadd.f32 %v555, %v626
      %v659 = vadd.f32 %v556, %v627
      %v660 = vadd.f32 %v557, %v628
      %v661 = vadd.f32 %v558, %v629
      %v662 = vadd.f32 %v559, %v630
      %v663 = vadd.f32 %v560, %v631
      %v664 = vadd.f32 %v561, %v632
      %v665 = vadd.f32 %v562, %v633
      %v666 = vadd.f32 %v563, %v634
      %v667 = vadd.f32 %v564, %v635
      %v668 = vadd.f32 %v565, %v636
      %v669 = vadd.f32 %v566, %v637
      %v670 = vadd.f32 %v567, %v638
      %v671 = vadd.f32 %v568, %v639
      %v672 = vadd.f32 %v569, %v640
      %v673 = vadd.f32 %v570, %v641
      %v674 = vadd.f32 %v571, %v642
      %v675 = vadd.f32 %v572, %v643
      %v676 = vadd.f32 %v573, %v644
      %v677 = vadd.f32 %v574, %v645
      %v678 = vadd.f32 %v575, %v646
      %v679 = vadd.f32 %v576, %v647
      %v680 = vld [vmem:[%s577 + $0x1] sm:$0xff]
      %v681 = vld [vmem:[%s577 + $0x9] sm:$0xff]
      %v682 = vld [vmem:[%s577 + $0x19] sm:$0xff]
      %v683 = vld [vmem:[%s577 + $0x21] sm:$0xff]
      %v684 = vld [vmem:[%s577 + $0x31] sm:$0xff]
      %v685 = vld [vmem:[%s577 + $0x39] sm:$0xff]
      %v686 = vld [vmem:[%s577 + $0x49] sm:$0xff]
      %v687 = vld [vmem:[%s577 + $0x51] sm:$0xff]
      %v688 = vld [vmem:[%s577 + $0x61] sm:$0xff]
      %v689 = vld [vmem:[%s577 + $0x69] sm:$0xff]
      %v690 = vld [vmem:[%s577 + $0x79] sm:$0xff]
      %v691 = vld [vmem:[%s577 + $0x81] sm:$0xff]
      %v692 = vld [vmem:[%s577 + $0x91] sm:$0xff]
      %v693 = vld [vmem:[%s577 + $0x99] sm:$0xff]
      %v694 = vld [vmem:[%s577 + $0xa9] sm:$0xff]
      %v695 = vld [vmem:[%s577 + $0xb1] sm:$0xff]
      %v696 = vld [vmem:[%s577 + $0xc1] sm:$0xff]
      %v697 = vld [vmem:[%s577 + $0xc9] sm:$0xff]
      %v698 = vld [vmem:[%s577 + $0xd9] sm:$0xff]
      %v699 = vld [vmem:[%s577 + $0xe1] sm:$0xff]
      %v700 = vld [vmem:[%s577 + $0xf1] sm:$0xff]
      %v701 = vld [vmem:[%s577 + $0xf9] sm:$0xff]
      %v702 = vld [vmem:[%s577 + $0x109] sm:$0xff]
      %v703 = vld [vmem:[%s577 + $0x111] sm:$0xff]
      %v704 = vld [vmem:[%s577 + $0x121] sm:$0xff]
      %v705 = vld [vmem:[%s577 + $0x129] sm:$0xff]
      %v706 = vld [vmem:[%s577 + $0x139] sm:$0xff]
      %v707 = vld [vmem:[%s577 + $0x141] sm:$0xff]
      %v708 = vld [vmem:[%s577 + $0x151] sm:$0xff]
      %v709 = vld [vmem:[%s577 + $0x159] sm:$0xff]
      %v710 = vld [vmem:[%s577 + $0x169] sm:$0xff]
      %v711 = vld [vmem:[%s577 + $0x171] sm:$0xff]
      %v712 = vld [vmem:[%s610 + $0x1] sm:$0x1]
      %v713 = vlaneseq
      %v714 = vshrl.u32 %v713, 7
      %v715 = vsub.s32 0, %v714
      %v716 = vrot.slane %v712, %v715
      %v717 = vmul.f32 %v680, %v716
      %v718 = vmul.f32 %v681, %v716
      %v719 = vmul.f32 %v682, %v716
      %v720 = vmul.f32 %v683, %v716
      %v721 = vmul.f32 %v684, %v716
      %v722 = vmul.f32 %v685, %v716
      %v723 = vmul.f32 %v686, %v716
      %v724 = vmul.f32 %v687, %v716
      %v725 = vmul.f32 %v688, %v716
      %v726 = vmul.f32 %v689, %v716
      %v727 = vmul.f32 %v690, %v716
      %v728 = vmul.f32 %v691, %v716
      %v729 = vmul.f32 %v692, %v716
      %v730 = vmul.f32 %v693, %v716
      %v731 = vmul.f32 %v694, %v716
      %v732 = vmul.f32 %v695, %v716
      %v733 = vmul.f32 %v696, %v716
      %v734 = vmul.f32 %v697, %v716
      %v735 = vmul.f32 %v698, %v716
      %v736 = vmul.f32 %v699, %v716
      %v737 = vmul.f32 %v700, %v716
      %v738 = vmul.f32 %v701, %v716
      %v739 = vmul.f32 %v702, %v716
      %v740 = vmul.f32 %v703, %v716
      %v741 = vmul.f32 %v704, %v716
      %v742 = vmul.f32 %v705, %v716
      %v743 = vmul.f32 %v706, %v716
      %v744 = vmul.f32 %v707, %v716
      %v745 = vmul.f32 %v708, %v716
      %v746 = vmul.f32 %v709, %v716
      %v747 = vmul.f32 %v710, %v716
      %v748 = vmul.f32 %v711, %v716
      %v749 = vadd.f32 %v648, %v717
      %v750 = vadd.f32 %v649, %v718
      %v751 = vadd.f32 %v650, %v719
      %v752 = vadd.f32 %v651, %v720
      %v753 = vadd.f32 %v652, %v721
      %v754 = vadd.f32 %v653, %v722
      %v755 = vadd.f32 %v654, %v723
      %v756 = vadd.f32 %v655, %v724
      %v757 = vadd.f32 %v656, %v725
      %v758 = vadd.f32 %v657, %v726
      %v759 = vadd.f32 %v658, %v727
      %v760 = vadd.f32 %v659, %v728
      %v761 = vadd.f32 %v660, %v729
      %v762 = vadd.f32 %v661, %v730
      %v763 = vadd.f32 %v662, %v731
      %v764 = vadd.f32 %v663, %v732
      %v765 = vadd.f32 %v664, %v733
      %v766 = vadd.f32 %v665, %v734
      %v767 = vadd.f32 %v666, %v735
      %v768 = vadd.f32 %v667, %v736
      %v769 = vadd.f32 %v668, %v737
      %v770 = vadd.f32 %v669, %v738
      %v771 = vadd.f32 %v670, %v739
      %v772 = vadd.f32 %v671, %v740
      %v773 = vadd.f32 %v672, %v741
      %v774 = vadd.f32 %v673, %v742
      %v775 = vadd.f32 %v674, %v743
      %v776 = vadd.f32 %v675, %v744
      %v777 = vadd.f32 %v676, %v745
      %v778 = vadd.f32 %v677, %v746
      %v779 = vadd.f32 %v678, %v747
      %v780 = vadd.f32 %v679, %v748
      %v781 = vld [vmem:[%s577 + $0x2] sm:$0xff]
      %v782 = vld [vmem:[%s577 + $0xa] sm:$0xff]
      %v783 = vld [vmem:[%s577 + $0x1a] sm:$0xff]
      %v784 = vld [vmem:[%s577 + $0x22] sm:$0xff]
      %v785 = vld [vmem:[%s577 + $0x32] sm:$0xff]
      %v786 = vld [vmem:[%s577 + $0x3a] sm:$0xff]
      %v787 = vld [vmem:[%s577 + $0x4a] sm:$0xff]
      %v788 = vld [vmem:[%s577 + $0x52] sm:$0xff]
      %v789 = vld [vmem:[%s577 + $0x62] sm:$0xff]
      %v790 = vld [vmem:[%s577 + $0x6a] sm:$0xff]
      %v791 = vld [vmem:[%s577 + $0x7a] sm:$0xff]
      %v792 = vld [vmem:[%s577 + $0x82] sm:$0xff]
      %v793 = vld [vmem:[%s577 + $0x92] sm:$0xff]
      %v794 = vld [vmem:[%s577 + $0x9a] sm:$0xff]
      %v795 = vld [vmem:[%s577 + $0xaa] sm:$0xff]
      %v796 = vld [vmem:[%s577 + $0xb2] sm:$0xff]
      %v797 = vld [vmem:[%s577 + $0xc2] sm:$0xff]
      %v798 = vld [vmem:[%s577 + $0xca] sm:$0xff]
      %v799 = vld [vmem:[%s577 + $0xda] sm:$0xff]
      %v800 = vld [vmem:[%s577 + $0xe2] sm:$0xff]
      %v801 = vld [vmem:[%s577 + $0xf2] sm:$0xff]
      %v802 = vld [vmem:[%s577 + $0xfa] sm:$0xff]
      %v803 = vld [vmem:[%s577 + $0x10a] sm:$0xff]
      %v804 = vld [vmem:[%s577 + $0x112] sm:$0xff]
      %v805 = vld [vmem:[%s577 + $0x122] sm:$0xff]
      %v806 = vld [vmem:[%s577 + $0x12a] sm:$0xff]
      %v807 = vld [vmem:[%s577 + $0x13a] sm:$0xff]
      %v808 = vld [vmem:[%s577 + $0x142] sm:$0xff]
      %v809 = vld [vmem:[%s577 + $0x152] sm:$0xff]
      %v810 = vld [vmem:[%s577 + $0x15a] sm:$0xff]
      %v811 = vld [vmem:[%s577 + $0x16a] sm:$0xff]
      %v812 = vld [vmem:[%s577 + $0x172] sm:$0xff]
      %v813 = vld [vmem:[%s610 + $0x2] sm:$0x1]
      %v814 = vlaneseq
      %v815 = vshrl.u32 %v814, 7
      %v816 = vsub.s32 0, %v815
      %v817 = vrot.slane %v813, %v816
      %v818 = vmul.f32 %v781, %v817
      %v819 = vmul.f32 %v782, %v817
      %v820 = vmul.f32 %v783, %v817
      %v821 = vmul.f32 %v784, %v817
      %v822 = vmul.f32 %v785, %v817
      %v823 = vmul.f32 %v786, %v817
      %v824 = vmul.f32 %v787, %v817
      %v825 = vmul.f32 %v788, %v817
      %v826 = vmul.f32 %v789, %v817
      %v827 = vmul.f32 %v790, %v817
      %v828 = vmul.f32 %v791, %v817
      %v829 = vmul.f32 %v792, %v817
      %v830 = vmul.f32 %v793, %v817
      %v831 = vmul.f32 %v794, %v817
      %v832 = vmul.f32 %v795, %v817
      %v833 = vmul.f32 %v796, %v817
      %v834 = vmul.f32 %v797, %v817
      %v835 = vmul.f32 %v798, %v817
      %v836 = vmul.f32 %v799, %v817
      %v837 = vmul.f32 %v800, %v817
      %v838 = vmul.f32 %v801, %v817
      %v839 = vmul.f32 %v802, %v817
      %v840 = vmul.f32 %v803, %v817
      %v841 = vmul.f32 %v804, %v817
      %v842 = vmul.f32 %v805, %v817
      %v843 = vmul.f32 %v806, %v817
      %v844 = vmul.f32 %v807, %v817
      %v845 = vmul.f32 %v808, %v817
      %v846 = vmul.f32 %v809, %v817
      %v847 = vmul.f32 %v810, %v817
      %v848 = vmul.f32 %v811, %v817
      %v849 = vmul.f32 %v812, %v817
      %v850 = vadd.f32 %v749, %v818
      %v851 = vadd.f32 %v750, %v819
      %v852 = vadd.f32 %v751, %v820
      %v853 = vadd.f32 %v752, %v821
      %v854 = vadd.f32 %v753, %v822
      %v855 = vadd.f32 %v754, %v823
      %v856 = vadd.f32 %v755, %v824
      %v857 = vadd.f32 %v756, %v825
      %v858 = vadd.f32 %v757, %v826
      %v859 = vadd.f32 %v758, %v827
      %v860 = vadd.f32 %v759, %v828
      %v861 = vadd.f32 %v760, %v829
      %v862 = vadd.f32 %v761, %v830
      %v863 = vadd.f32 %v762, %v831
      %v864 = vadd.f32 %v763, %v832
      %v865 = vadd.f32 %v764, %v833
      %v866 = vadd.f32 %v765, %v834
      %v867 = vadd.f32 %v766, %v835
      %v868 = vadd.f32 %v767, %v836
      %v869 = vadd.f32 %v768, %v837
      %v870 = vadd.f32 %v769, %v838
      %v871 = vadd.f32 %v770, %v839
      %v872 = vadd.f32 %v771, %v840
      %v873 = vadd.f32 %v772, %v841
      %v874 = vadd.f32 %v773, %v842
      %v875 = vadd.f32 %v774, %v843
      %v876 = vadd.f32 %v775, %v844
      %v877 = vadd.f32 %v776, %v845
      %v878 = vadd.f32 %v777, %v846
      %v879 = vadd.f32 %v778, %v847
      %v880 = vadd.f32 %v779, %v848
      %v881 = vadd.f32 %v780, %v849
      %s882 = scalar_lea.vmem %s255, 48
      %v883 = vld [vmem:[%s882] sm:$0xff]
      %v884 = vld [vmem:[%s882 + $0x8] sm:$0xff]
      %v885 = vld [vmem:[%s882 + $0x18] sm:$0xff]
      %v886 = vld [vmem:[%s882 + $0x20] sm:$0xff]
      %v887 = vld [vmem:[%s882 + $0x30] sm:$0xff]
      %v888 = vld [vmem:[%s882 + $0x38] sm:$0xff]
      %v889 = vld [vmem:[%s882 + $0x48] sm:$0xff]
      %v890 = vld [vmem:[%s882 + $0x50] sm:$0xff]
      %v891 = vld [vmem:[%s882 + $0x60] sm:$0xff]
      %v892 = vld [vmem:[%s882 + $0x68] sm:$0xff]
      %v893 = vld [vmem:[%s882 + $0x78] sm:$0xff]
      %v894 = vld [vmem:[%s882 + $0x80] sm:$0xff]
      %v895 = vld [vmem:[%s882 + $0x90] sm:$0xff]
      %v896 = vld [vmem:[%s882 + $0x98] sm:$0xff]
      %v897 = vld [vmem:[%s882 + $0xa8] sm:$0xff]
      %v898 = vld [vmem:[%s882 + $0xb0] sm:$0xff]
      %v899 = vld [vmem:[%s882 + $0xc0] sm:$0xff]
      %v900 = vld [vmem:[%s882 + $0xc8] sm:$0xff]
      %v901 = vld [vmem:[%s882 + $0xd8] sm:$0xff]
      %v902 = vld [vmem:[%s882 + $0xe0] sm:$0xff]
      %v903 = vld [vmem:[%s882 + $0xf0] sm:$0xff]
      %v904 = vld [vmem:[%s882 + $0xf8] sm:$0xff]
      %v905 = vld [vmem:[%s882 + $0x108] sm:$0xff]
      %v906 = vld [vmem:[%s882 + $0x110] sm:$0xff]
      %v907 = vld [vmem:[%s882 + $0x120] sm:$0xff]
      %v908 = vld [vmem:[%s882 + $0x128] sm:$0xff]
      %v909 = vld [vmem:[%s882 + $0x138] sm:$0xff]
      %v910 = vld [vmem:[%s882 + $0x140] sm:$0xff]
      %v911 = vld [vmem:[%s882 + $0x150] sm:$0xff]
      %v912 = vld [vmem:[%s882 + $0x158] sm:$0xff]
      %v913 = vld [vmem:[%s882 + $0x168] sm:$0xff]
      %v914 = vld [vmem:[%s882 + $0x170] sm:$0xff]
      %s915 = scalar_lea.vmem %s259, 8
      %v916 = vld [vmem:[%s915] sm:$0x1]
      %v917 = vlaneseq
      %v918 = vshrl.u32 %v917, 7
      %v919 = vsub.s32 0, %v918
      %v920 = vrot.slane %v916, %v919
      %v921 = vmul.f32 %v883, %v920
      %v922 = vmul.f32 %v884, %v920
      %v923 = vmul.f32 %v885, %v920
      %v924 = vmul.f32 %v886, %v920
      %v925 = vmul.f32 %v887, %v920
      %v926 = vmul.f32 %v888, %v920
      %v927 = vmul.f32 %v889, %v920
      %v928 = vmul.f32 %v890, %v920
      %v929 = vmul.f32 %v891, %v920
      %v930 = vmul.f32 %v892, %v920
      %v931 = vmul.f32 %v893, %v920
      %v932 = vmul.f32 %v894, %v920
      %v933 = vmul.f32 %v895, %v920
      %v934 = vmul.f32 %v896, %v920
      %v935 = vmul.f32 %v897, %v920
      %v936 = vmul.f32 %v898, %v920
      %v937 = vmul.f32 %v899, %v920
      %v938 = vmul.f32 %v900, %v920
      %v939 = vmul.f32 %v901, %v920
      %v940 = vmul.f32 %v902, %v920
      %v941 = vmul.f32 %v903, %v920
      %v942 = vmul.f32 %v904, %v920
      %v943 = vmul.f32 %v905, %v920
      %v944 = vmul.f32 %v906, %v920
      %v945 = vmul.f32 %v907, %v920
      %v946 = vmul.f32 %v908, %v920
      %v947 = vmul.f32 %v909, %v920
      %v948 = vmul.f32 %v910, %v920
      %v949 = vmul.f32 %v911, %v920
      %v950 = vmul.f32 %v912, %v920
      %v951 = vmul.f32 %v913, %v920
      %v952 = vmul.f32 %v914, %v920
      %v953 = vadd.f32 %v850, %v921
      %v954 = vadd.f32 %v851, %v922
      %v955 = vadd.f32 %v852, %v923
      %v956 = vadd.f32 %v853, %v924
      %v957 = vadd.f32 %v854, %v925
      %v958 = vadd.f32 %v855, %v926
      %v959 = vadd.f32 %v856, %v927
      %v960 = vadd.f32 %v857, %v928
      %v961 = vadd.f32 %v858, %v929
      %v962 = vadd.f32 %v859, %v930
      %v963 = vadd.f32 %v860, %v931
      %v964 = vadd.f32 %v861, %v932
      %v965 = vadd.f32 %v862, %v933
      %v966 = vadd.f32 %v863, %v934
      %v967 = vadd.f32 %v864, %v935
      %v968 = vadd.f32 %v865, %v936
      %v969 = vadd.f32 %v866, %v937
      %v970 = vadd.f32 %v867, %v938
      %v971 = vadd.f32 %v868, %v939
      %v972 = vadd.f32 %v869, %v940
      %v973 = vadd.f32 %v870, %v941
      %v974 = vadd.f32 %v871, %v942
      %v975 = vadd.f32 %v872, %v943
      %v976 = vadd.f32 %v873, %v944
      %v977 = vadd.f32 %v874, %v945
      %v978 = vadd.f32 %v875, %v946
      %v979 = vadd.f32 %v876, %v947
      %v980 = vadd.f32 %v877, %v948
      %v981 = vadd.f32 %v878, %v949
      %v982 = vadd.f32 %v879, %v950
      %v983 = vadd.f32 %v880, %v951
      %v984 = vadd.f32 %v881, %v952
      %v985 = vld [vmem:[%s882 + $0x1] sm:$0xff]
      %v986 = vld [vmem:[%s882 + $0x9] sm:$0xff]
      %v987 = vld [vmem:[%s882 + $0x19] sm:$0xff]
      %v988 = vld [vmem:[%s882 + $0x21] sm:$0xff]
      %v989 = vld [vmem:[%s882 + $0x31] sm:$0xff]
      %v990 = vld [vmem:[%s882 + $0x39] sm:$0xff]
      %v991 = vld [vmem:[%s882 + $0x49] sm:$0xff]
      %v992 = vld [vmem:[%s882 + $0x51] sm:$0xff]
      %v993 = vld [vmem:[%s882 + $0x61] sm:$0xff]
      %v994 = vld [vmem:[%s882 + $0x69] sm:$0xff]
      %v995 = vld [vmem:[%s882 + $0x79] sm:$0xff]
      %v996 = vld [vmem:[%s882 + $0x81] sm:$0xff]
      %v997 = vld [vmem:[%s882 + $0x91] sm:$0xff]
      %v998 = vld [vmem:[%s882 + $0x99] sm:$0xff]
      %v999 = vld [vmem:[%s882 + $0xa9] sm:$0xff]
      %v1000 = vld [vmem:[%s882 + $0xb1] sm:$0xff]
      %v1001 = vld [vmem:[%s882 + $0xc1] sm:$0xff]
      %v1002 = vld [vmem:[%s882 + $0xc9] sm:$0xff]
      %v1003 = vld [vmem:[%s882 + $0xd9] sm:$0xff]
      %v1004 = vld [vmem:[%s882 + $0xe1] sm:$0xff]
      %v1005 = vld [vmem:[%s882 + $0xf1] sm:$0xff]
      %v1006 = vld [vmem:[%s882 + $0xf9] sm:$0xff]
      %v1007 = vld [vmem:[%s882 + $0x109] sm:$0xff]
      %v1008 = vld [vmem:[%s882 + $0x111] sm:$0xff]
      %v1009 = vld [vmem:[%s882 + $0x121] sm:$0xff]
      %v1010 = vld [vmem:[%s882 + $0x129] sm:$0xff]
      %v1011 = vld [vmem:[%s882 + $0x139] sm:$0xff]
      %v1012 = vld [vmem:[%s882 + $0x141] sm:$0xff]
      %v1013 = vld [vmem:[%s882 + $0x151] sm:$0xff]
      %v1014 = vld [vmem:[%s882 + $0x159] sm:$0xff]
      %v1015 = vld [vmem:[%s882 + $0x169] sm:$0xff]
      %v1016 = vld [vmem:[%s882 + $0x171] sm:$0xff]
      %v1017 = vld [vmem:[%s915 + $0x1] sm:$0x1]
      %v1018 = vlaneseq
      %v1019 = vshrl.u32 %v1018, 7
      %v1020 = vsub.s32 0, %v1019
      %v1021 = vrot.slane %v1017, %v1020
      %v1022 = vmul.f32 %v985, %v1021
      %v1023 = vmul.f32 %v986, %v1021
      %v1024 = vmul.f32 %v987, %v1021
      %v1025 = vmul.f32 %v988, %v1021
      %v1026 = vmul.f32 %v989, %v1021
      %v1027 = vmul.f32 %v990, %v1021
      %v1028 = vmul.f32 %v991, %v1021
      %v1029 = vmul.f32 %v992, %v1021
      %v1030 = vmul.f32 %v993, %v1021
      %v1031 = vmul.f32 %v994, %v1021
      %v1032 = vmul.f32 %v995, %v1021
      %v1033 = vmul.f32 %v996, %v1021
      %v1034 = vmul.f32 %v997, %v1021
      %v1035 = vmul.f32 %v998, %v1021
      %v1036 = vmul.f32 %v999, %v1021
      %v1037 = vmul.f32 %v1000, %v1021
      %v1038 = vmul.f32 %v1001, %v1021
      %v1039 = vmul.f32 %v1002, %v1021
      %v1040 = vmul.f32 %v1003, %v1021
      %v1041 = vmul.f32 %v1004, %v1021
      %v1042 = vmul.f32 %v1005, %v1021
      %v1043 = vmul.f32 %v1006, %v1021
      %v1044 = vmul.f32 %v1007, %v1021
      %v1045 = vmul.f32 %v1008, %v1021
      %v1046 = vmul.f32 %v1009, %v1021
      %v1047 = vmul.f32 %v1010, %v1021
      %v1048 = vmul.f32 %v1011, %v1021
      %v1049 = vmul.f32 %v1012, %v1021
      %v1050 = vmul.f32 %v1013, %v1021
      %v1051 = vmul.f32 %v1014, %v1021
      %v1052 = vmul.f32 %v1015, %v1021
      %v1053 = vmul.f32 %v1016, %v1021
      %v1054 = vadd.f32 %v953, %v1022
      %v1055 = vadd.f32 %v954, %v1023
      %v1056 = vadd.f32 %v955, %v1024
      %v1057 = vadd.f32 %v956, %v1025
      %v1058 = vadd.f32 %v957, %v1026
      %v1059 = vadd.f32 %v958, %v1027
      %v1060 = vadd.f32 %v959, %v1028
      %v1061 = vadd.f32 %v960, %v1029
      %v1062 = vadd.f32 %v961, %v1030
      %v1063 = vadd.f32 %v962, %v1031
      %v1064 = vadd.f32 %v963, %v1032
      %v1065 = vadd.f32 %v964, %v1033
      %v1066 = vadd.f32 %v965, %v1034
      %v1067 = vadd.f32 %v966, %v1035
      %v1068 = vadd.f32 %v967, %v1036
      %v1069 = vadd.f32 %v968, %v1037
      %v1070 = vadd.f32 %v969, %v1038
      %v1071 = vadd.f32 %v970, %v1039
      %v1072 = vadd.f32 %v971, %v1040
      %v1073 = vadd.f32 %v972, %v1041
      %v1074 = vadd.f32 %v973, %v1042
      %v1075 = vadd.f32 %v974, %v1043
      %v1076 = vadd.f32 %v975, %v1044
      %v1077 = vadd.f32 %v976, %v1045
      %v1078 = vadd.f32 %v977, %v1046
      %v1079 = vadd.f32 %v978, %v1047
      %v1080 = vadd.f32 %v979, %v1048
      %v1081 = vadd.f32 %v980, %v1049
      %v1082 = vadd.f32 %v981, %v1050
      %v1083 = vadd.f32 %v982, %v1051
      %v1084 = vadd.f32 %v983, %v1052
      %v1085 = vadd.f32 %v984, %v1053
      %v1086 = vld [vmem:[%s882 + $0x2] sm:$0xff]
      %v1087 = vld [vmem:[%s882 + $0xa] sm:$0xff]
      %v1088 = vld [vmem:[%s882 + $0x1a] sm:$0xff]
      %v1089 = vld [vmem:[%s882 + $0x22] sm:$0xff]
      %v1090 = vld [vmem:[%s882 + $0x32] sm:$0xff]
      %v1091 = vld [vmem:[%s882 + $0x3a] sm:$0xff]
      %v1092 = vld [vmem:[%s882 + $0x4a] sm:$0xff]
      %v1093 = vld [vmem:[%s882 + $0x52] sm:$0xff]
      %v1094 = vld [vmem:[%s882 + $0x62] sm:$0xff]
      %v1095 = vld [vmem:[%s882 + $0x6a] sm:$0xff]
      %v1096 = vld [vmem:[%s882 + $0x7a] sm:$0xff]
      %v1097 = vld [vmem:[%s882 + $0x82] sm:$0xff]
      %v1098 = vld [vmem:[%s882 + $0x92] sm:$0xff]
      %v1099 = vld [vmem:[%s882 + $0x9a] sm:$0xff]
      %v1100 = vld [vmem:[%s882 + $0xaa] sm:$0xff]
      %v1101 = vld [vmem:[%s882 + $0xb2] sm:$0xff]
      %v1102 = vld [vmem:[%s882 + $0xc2] sm:$0xff]
      %v1103 = vld [vmem:[%s882 + $0xca] sm:$0xff]
      %v1104 = vld [vmem:[%s882 + $0xda] sm:$0xff]
      %v1105 = vld [vmem:[%s882 + $0xe2] sm:$0xff]
      %v1106 = vld [vmem:[%s882 + $0xf2] sm:$0xff]
      %v1107 = vld [vmem:[%s882 + $0xfa] sm:$0xff]
      %v1108 = vld [vmem:[%s882 + $0x10a] sm:$0xff]
      %v1109 = vld [vmem:[%s882 + $0x112] sm:$0xff]
      %v1110 = vld [vmem:[%s882 + $0x122] sm:$0xff]
      %v1111 = vld [vmem:[%s882 + $0x12a] sm:$0xff]
      %v1112 = vld [vmem:[%s882 + $0x13a] sm:$0xff]
      %v1113 = vld [vmem:[%s882 + $0x142] sm:$0xff]
      %v1114 = vld [vmem:[%s882 + $0x152] sm:$0xff]
      %v1115 = vld [vmem:[%s882 + $0x15a] sm:$0xff]
      %v1116 = vld [vmem:[%s882 + $0x16a] sm:$0xff]
      %v1117 = vld [vmem:[%s882 + $0x172] sm:$0xff]
      %v1118 = vld [vmem:[%s915 + $0x2] sm:$0x1]
      %v1119 = vlaneseq
      %v1120 = vshrl.u32 %v1119, 7
      %v1121 = vsub.s32 0, %v1120
      %v1122 = vrot.slane %v1118, %v1121
      %v1123 = vmul.f32 %v1086, %v1122
      %v1124 = vmul.f32 %v1087, %v1122
      %v1125 = vmul.f32 %v1088, %v1122
      %v1126 = vmul.f32 %v1089, %v1122
      %v1127 = vmul.f32 %v1090, %v1122
      %v1128 = vmul.f32 %v1091, %v1122
      %v1129 = vmul.f32 %v1092, %v1122
      %v1130 = vmul.f32 %v1093, %v1122
      %v1131 = vmul.f32 %v1094, %v1122
      %v1132 = vmul.f32 %v1095, %v1122
      %v1133 = vmul.f32 %v1096, %v1122
      %v1134 = vmul.f32 %v1097, %v1122
      %v1135 = vmul.f32 %v1098, %v1122
      %v1136 = vmul.f32 %v1099, %v1122
      %v1137 = vmul.f32 %v1100, %v1122
      %v1138 = vmul.f32 %v1101, %v1122
      %v1139 = vmul.f32 %v1102, %v1122
      %v1140 = vmul.f32 %v1103, %v1122
      %v1141 = vmul.f32 %v1104, %v1122
      %v1142 = vmul.f32 %v1105, %v1122
      %v1143 = vmul.f32 %v1106, %v1122
      %v1144 = vmul.f32 %v1107, %v1122
      %v1145 = vmul.f32 %v1108, %v1122
      %v1146 = vmul.f32 %v1109, %v1122
      %v1147 = vmul.f32 %v1110, %v1122
      %v1148 = vmul.f32 %v1111, %v1122
      %v1149 = vmul.f32 %v1112, %v1122
      %v1150 = vmul.f32 %v1113, %v1122
      %v1151 = vmul.f32 %v1114, %v1122
      %v1152 = vmul.f32 %v1115, %v1122
      %v1153 = vmul.f32 %v1116, %v1122
      %v1154 = vmul.f32 %v1117, %v1122
      %v1155 = vadd.f32 %v1054, %v1123
      %v1156 = vadd.f32 %v1055, %v1124
      %v1157 = vadd.f32 %v1056, %v1125
      %v1158 = vadd.f32 %v1057, %v1126
      %v1159 = vadd.f32 %v1058, %v1127
      %v1160 = vadd.f32 %v1059, %v1128
      %v1161 = vadd.f32 %v1060, %v1129
      %v1162 = vadd.f32 %v1061, %v1130
      %v1163 = vadd.f32 %v1062, %v1131
      %v1164 = vadd.f32 %v1063, %v1132
      %v1165 = vadd.f32 %v1064, %v1133
      %v1166 = vadd.f32 %v1065, %v1134
      %v1167 = vadd.f32 %v1066, %v1135
      %v1168 = vadd.f32 %v1067, %v1136
      %v1169 = vadd.f32 %v1068, %v1137
      %v1170 = vadd.f32 %v1069, %v1138
      %v1171 = vadd.f32 %v1070, %v1139
      %v1172 = vadd.f32 %v1071, %v1140
      %v1173 = vadd.f32 %v1072, %v1141
      %v1174 = vadd.f32 %v1073, %v1142
      %v1175 = vadd.f32 %v1074, %v1143
      %v1176 = vadd.f32 %v1075, %v1144
      %v1177 = vadd.f32 %v1076, %v1145
      %v1178 = vadd.f32 %v1077, %v1146
      %v1179 = vadd.f32 %v1078, %v1147
      %v1180 = vadd.f32 %v1079, %v1148
      %v1181 = vadd.f32 %v1080, %v1149
      %v1182 = vadd.f32 %v1081, %v1150
      %v1183 = vadd.f32 %v1082, %v1151
      %v1184 = vadd.f32 %v1083, %v1152
      %v1185 = vadd.f32 %v1084, %v1153
      %v1186 = vadd.f32 %v1085, %v1154
      %v1187 = vld [vmem:[%s262] sm:$0x1]
      %v1189 = vlaneseq
      %v1190 = vshrl.u32 %v1189, 7
      %v1191 = vsub.s32 0, %v1190
      %v1192 = vrot.slane %v1187, %v1191
      %v1194 = vmul.f32 %v1155, %v1192
      %v1195 = vmul.f32 %v1156, %v1192
      %v1196 = vmul.f32 %v1157, %v1192
      %v1197 = vmul.f32 %v1158, %v1192
      %v1198 = vmul.f32 %v1159, %v1192
      %v1199 = vmul.f32 %v1160, %v1192
      %v1200 = vmul.f32 %v1161, %v1192
      %v1201 = vmul.f32 %v1162, %v1192
      %v1202 = vmul.f32 %v1163, %v1192
      %v1203 = vmul.f32 %v1164, %v1192
      %v1204 = vmul.f32 %v1165, %v1192
      %v1205 = vmul.f32 %v1166, %v1192
      %v1206 = vmul.f32 %v1167, %v1192
      %v1207 = vmul.f32 %v1168, %v1192
      %v1208 = vmul.f32 %v1169, %v1192
      %v1209 = vmul.f32 %v1170, %v1192
      %v1210 = vmul.f32 %v1171, %v1192
      %v1211 = vmul.f32 %v1172, %v1192
      %v1212 = vmul.f32 %v1173, %v1192
      %v1213 = vmul.f32 %v1174, %v1192
      %v1214 = vmul.f32 %v1175, %v1192
      %v1215 = vmul.f32 %v1176, %v1192
      %v1216 = vmul.f32 %v1177, %v1192
      %v1217 = vmul.f32 %v1178, %v1192
      %v1218 = vmul.f32 %v1179, %v1192
      %v1219 = vmul.f32 %v1180, %v1192
      %v1220 = vmul.f32 %v1181, %v1192
      %v1221 = vmul.f32 %v1182, %v1192
      %v1222 = vmul.f32 %v1183, %v1192
      %v1223 = vmul.f32 %v1184, %v1192
      %v1224 = vmul.f32 %v1185, %v1192
      %v1225 = vmul.f32 %v1186, %v1192
      %v1226 = vld [vmem:[%s265] sm:$0x1]
      %v1228 = vlaneseq
      %v1229 = vshrl.u32 %v1228, 7
      %v1230 = vsub.s32 0, %v1229
      %v1231 = vrot.slane %v1226, %v1230
      %v1233 = vadd.f32 %v1194, %v1231
      %v1234 = vadd.f32 %v1195, %v1231
      %v1235 = vadd.f32 %v1196, %v1231
      %v1236 = vadd.f32 %v1197, %v1231
      %v1237 = vadd.f32 %v1198, %v1231
      %v1238 = vadd.f32 %v1199, %v1231
      %v1239 = vadd.f32 %v1200, %v1231
      %v1240 = vadd.f32 %v1201, %v1231
      %v1241 = vadd.f32 %v1202, %v1231
      %v1242 = vadd.f32 %v1203, %v1231
      %v1243 = vadd.f32 %v1204, %v1231
      %v1244 = vadd.f32 %v1205, %v1231
      %v1245 = vadd.f32 %v1206, %v1231
      %v1246 = vadd.f32 %v1207, %v1231
      %v1247 = vadd.f32 %v1208, %v1231
      %v1248 = vadd.f32 %v1209, %v1231
      %v1249 = vadd.f32 %v1210, %v1231
      %v1250 = vadd.f32 %v1211, %v1231
      %v1251 = vadd.f32 %v1212, %v1231
      %v1252 = vadd.f32 %v1213, %v1231
      %v1253 = vadd.f32 %v1214, %v1231
      %v1254 = vadd.f32 %v1215, %v1231
      %v1255 = vadd.f32 %v1216, %v1231
      %v1256 = vadd.f32 %v1217, %v1231
      %v1257 = vadd.f32 %v1218, %v1231
      %v1258 = vadd.f32 %v1219, %v1231
      %v1259 = vadd.f32 %v1220, %v1231
      %v1260 = vadd.f32 %v1221, %v1231
      %v1261 = vadd.f32 %v1222, %v1231
      %v1262 = vadd.f32 %v1223, %v1231
      %v1263 = vadd.f32 %v1224, %v1231
      %v1264 = vadd.f32 %v1225, %v1231
      %v1265 = vmax.f32 %v1233, 0.0
      %v1266 = vmax.f32 %v1234, 0.0
      %v1267 = vmax.f32 %v1235, 0.0
      %v1268 = vmax.f32 %v1236, 0.0
      %v1269 = vmax.f32 %v1237, 0.0
      %v1270 = vmax.f32 %v1238, 0.0
      %v1271 = vmax.f32 %v1239, 0.0
      %v1272 = vmax.f32 %v1240, 0.0
      %v1273 = vmax.f32 %v1241, 0.0
      %v1274 = vmax.f32 %v1242, 0.0
      %v1275 = vmax.f32 %v1243, 0.0
      %v1276 = vmax.f32 %v1244, 0.0
      %v1277 = vmax.f32 %v1245, 0.0
      %v1278 = vmax.f32 %v1246, 0.0
      %v1279 = vmax.f32 %v1247, 0.0
      %v1280 = vmax.f32 %v1248, 0.0
      %v1281 = vmax.f32 %v1249, 0.0
      %v1282 = vmax.f32 %v1250, 0.0
      %v1283 = vmax.f32 %v1251, 0.0
      %v1284 = vmax.f32 %v1252, 0.0
      %v1285 = vmax.f32 %v1253, 0.0
      %v1286 = vmax.f32 %v1254, 0.0
      %v1287 = vmax.f32 %v1255, 0.0
      %v1288 = vmax.f32 %v1256, 0.0
      %v1289 = vmax.f32 %v1257, 0.0
      %v1290 = vmax.f32 %v1258, 0.0
      %v1291 = vmax.f32 %v1259, 0.0
      %v1292 = vmax.f32 %v1260, 0.0
      %v1293 = vmax.f32 %v1261, 0.0
      %v1294 = vmax.f32 %v1262, 0.0
      %v1295 = vmax.f32 %v1263, 0.0
      %v1296 = vmax.f32 %v1264, 0.0
      %v1297 = vpack.c.bf16 %v1266, %v1265
      %v1298 = vpack.c.bf16 %v1268, %v1267
      %v1299 = vpack.c.bf16 %v1270, %v1269
      %v1300 = vpack.c.bf16 %v1272, %v1271
      %v1301 = vpack.c.bf16 %v1274, %v1273
      %v1302 = vpack.c.bf16 %v1276, %v1275
      %v1303 = vpack.c.bf16 %v1278, %v1277
      %v1304 = vpack.c.bf16 %v1280, %v1279
      %v1305 = vpack.c.bf16 %v1282, %v1281
      %v1306 = vpack.c.bf16 %v1284, %v1283
      %v1307 = vpack.c.bf16 %v1286, %v1285
      %v1308 = vpack.c.bf16 %v1288, %v1287
      %v1309 = vpack.c.bf16 %v1290, %v1289
      %v1310 = vpack.c.bf16 %v1292, %v1291
      %v1311 = vpack.c.bf16 %v1294, %v1293
      %v1312 = vpack.c.bf16 %v1296, %v1295
      %v1329 = vunpack.c.l.b16 %v1297
      %v1330 = vunpack.c.h.b16 %v1297
      %v1331 = vunpack.c.l.b16 %v1298
      %v1332 = vunpack.c.h.b16 %v1298
      %v1333 = vunpack.c.l.b16 %v1299
      %v1334 = vunpack.c.h.b16 %v1299
      %v1335 = vunpack.c.l.b16 %v1300
      %v1336 = vunpack.c.h.b16 %v1300
      %v1337 = vunpack.c.l.b16 %v1301
      %v1338 = vunpack.c.h.b16 %v1301
      %v1339 = vunpack.c.l.b16 %v1302
      %v1340 = vunpack.c.h.b16 %v1302
      %v1341 = vunpack.c.l.b16 %v1303
      %v1342 = vunpack.c.h.b16 %v1303
      %v1343 = vunpack.c.l.b16 %v1304
      %v1344 = vunpack.c.h.b16 %v1304
      %v1345 = vunpack.c.l.b16 %v1305
      %v1346 = vunpack.c.h.b16 %v1305
      %v1347 = vunpack.c.l.b16 %v1306
      %v1348 = vunpack.c.h.b16 %v1306
      %v1349 = vunpack.c.l.b16 %v1307
      %v1350 = vunpack.c.h.b16 %v1307
      %v1351 = vunpack.c.l.b16 %v1308
      %v1352 = vunpack.c.h.b16 %v1308
      %v1353 = vunpack.c.l.b16 %v1309
      %v1354 = vunpack.c.h.b16 %v1309
      %v1355 = vunpack.c.l.b16 %v1310
      %v1356 = vunpack.c.h.b16 %v1310
      %v1357 = vunpack.c.l.b16 %v1311
      %v1358 = vunpack.c.h.b16 %v1311
      %v1359 = vunpack.c.l.b16 %v1312
      %v1360 = vunpack.c.h.b16 %v1312
      %v1361 = vpack.c.b16 %v1329, %v1329
      %v1362 = vpack.c.b16 %v1330, %v1330
      %v1363 = vpack.c.b16 %v1331, %v1331
      %v1364 = vpack.c.b16 %v1332, %v1332
      %v1365 = vpack.c.b16 %v1333, %v1333
      %v1366 = vpack.c.b16 %v1334, %v1334
      %v1367 = vpack.c.b16 %v1335, %v1335
      %v1368 = vpack.c.b16 %v1336, %v1336
      %v1369 = vpack.c.b16 %v1337, %v1337
      %v1370 = vpack.c.b16 %v1338, %v1338
      %v1371 = vpack.c.b16 %v1339, %v1339
      %v1372 = vpack.c.b16 %v1340, %v1340
      %v1373 = vpack.c.b16 %v1341, %v1341
      %v1374 = vpack.c.b16 %v1342, %v1342
      %v1375 = vpack.c.b16 %v1343, %v1343
      %v1376 = vpack.c.b16 %v1344, %v1344
      %v1377 = vpack.c.b16 %v1345, %v1345
      %v1378 = vpack.c.b16 %v1346, %v1346
      %v1379 = vpack.c.b16 %v1347, %v1347
      %v1380 = vpack.c.b16 %v1348, %v1348
      %v1381 = vpack.c.b16 %v1349, %v1349
      %v1382 = vpack.c.b16 %v1350, %v1350
      %v1383 = vpack.c.b16 %v1351, %v1351
      %v1384 = vpack.c.b16 %v1352, %v1352
      %v1385 = vpack.c.b16 %v1353, %v1353
      %v1386 = vpack.c.b16 %v1354, %v1354
      %v1387 = vpack.c.b16 %v1355, %v1355
      %v1388 = vpack.c.b16 %v1356, %v1356
      %v1389 = vpack.c.b16 %v1357, %v1357
      %v1390 = vpack.c.b16 %v1358, %v1358
      %v1391 = vpack.c.b16 %v1359, %v1359
      %v1392 = vpack.c.b16 %v1360, %v1360
      %1425 = vst [vmem:[%s273] sm:$0xf] %v1361
      %1426 = vst [vmem:[%s273 + $0x4] sm:$0xf] %v1362
      %1427 = vst [vmem:[%s273 + $0x8] sm:$0xf] %v1363
      %1428 = vst [vmem:[%s273 + $0xc] sm:$0xf] %v1364
      %1429 = vst [vmem:[%s273 + $0x10] sm:$0xf] %v1365
      %1430 = vst [vmem:[%s273 + $0x14] sm:$0xf] %v1366
      %1431 = vst [vmem:[%s273 + $0x18] sm:$0xf] %v1367
      %1432 = vst [vmem:[%s273 + $0x1c] sm:$0xf] %v1368
      %1433 = vst [vmem:[%s273 + $0x20] sm:$0xf] %v1369
      %1434 = vst [vmem:[%s273 + $0x24] sm:$0xf] %v1370
      %1435 = vst [vmem:[%s273 + $0x28] sm:$0xf] %v1371
      %1436 = vst [vmem:[%s273 + $0x2c] sm:$0xf] %v1372
      %1437 = vst [vmem:[%s273 + $0x30] sm:$0xf] %v1373
      %1438 = vst [vmem:[%s273 + $0x34] sm:$0xf] %v1374
      %1439 = vst [vmem:[%s273 + $0x38] sm:$0xf] %v1375
      %1440 = vst [vmem:[%s273 + $0x3c] sm:$0xf] %v1376
      %1441 = vst [vmem:[%s273 + $0x40] sm:$0xf] %v1377
      %1442 = vst [vmem:[%s273 + $0x44] sm:$0xf] %v1378
      %1443 = vst [vmem:[%s273 + $0x48] sm:$0xf] %v1379
      %1444 = vst [vmem:[%s273 + $0x4c] sm:$0xf] %v1380
      %1445 = vst [vmem:[%s273 + $0x50] sm:$0xf] %v1381
      %1446 = vst [vmem:[%s273 + $0x54] sm:$0xf] %v1382
      %1447 = vst [vmem:[%s273 + $0x58] sm:$0xf] %v1383
      %1448 = vst [vmem:[%s273 + $0x5c] sm:$0xf] %v1384
      %1449 = vst [vmem:[%s273 + $0x60] sm:$0xf] %v1385
      %1450 = vst [vmem:[%s273 + $0x64] sm:$0xf] %v1386
      %1451 = vst [vmem:[%s273 + $0x68] sm:$0xf] %v1387
      %1452 = vst [vmem:[%s273 + $0x6c] sm:$0xf] %v1388
      %1453 = vst [vmem:[%s273 + $0x70] sm:$0xf] %v1389
      %1454 = vst [vmem:[%s273 + $0x74] sm:$0xf] %v1390
      %1455 = vst [vmem:[%s273 + $0x78] sm:$0xf] %v1391
      %1456 = vst [vmem:[%s273 + $0x7c] sm:$0xf] %v1392
      %p1457 = scmp.lt.s32.totalorder %s19, 1
      %s1458 = scalar_select %p1457, %s19, 1
      %p1459 = scmp.lt.s32.totalorder %s20, 0
      %s1460 = scalar_select %p1459, %s20, 0
      %s1461 = smul.addr %s1458, 32
      %s1462 = sadd.s32 %s1460, %s1461
      %s1463 = smul.addr %s1462, 4
      %s1464 = scalar_lea.vmem %s4, %s1463
      // Predicated region
      $region37: #{block_forward.2} parent=35 // pred_check
        %p1465 = pneg %p153
      $region38: #{block_forward.2} parent=35 // pred_check_branch
        %1467 = sbr.rel (%p1465) target = $region40
      $region39: #{block_forward.2} parent=35 // pred_region
        _
      $region40: #{block_forward.2} parent=35 // pred_fallthru
        _
    $region36: #{block_forward.2} parent=5 // pred_fallthru
      _
    %p1468 = scmp.le.s32.totalorder 2, %s10
    // Predicated region
    $region41: #{block_forward.2} parent=5 // pred_check
      %p1469 = pneg %p1468
    $region42: #{block_forward.2} parent=5 // pred_check_branch
      %1471 = sbr.rel (%p1469) target = $region44
    $region43: #{block_forward.2} parent=5 // pred_region
      %s1472 = ssub.s32 %s10, 2
      // Predicated region
      $region45: #{block_forward.2} parent=43 // pred_check
        %p1473 = pneg %p159
      $region46: #{block_forward.2} parent=43 // pred_check_branch
        %1475 = sbr.rel (%p1473) target = $region48
      $region47: #{block_forward.2} parent=43 // pred_region
        %p1476 = scmp.lt.s32.totalorder %s21, 1
        %s1477 = scalar_select %p1476, %s21, 1
        %p1478 = scmp.lt.s32.totalorder %s22, 0
        %s1479 = scalar_select %p1478, %s22, 0
        %s1480 = smul.addr %s1477, 32
        %s1481 = sadd.s32 %s1479, %s1480
        %s1482 = smul.addr %s1481, 4
        %s1483 = scalar_lea.vmem %s4, %s1482
      $region48: #{block_forward.2} parent=43 // pred_fallthru
        _
    $region44: #{block_forward.2} parent=5 // pred_fallthru
      _
  $region6: #{block_forward.2} parent=0 // loop_footer
    %s14 = sadd.s32 1, %s10
  $region7: #{block_forward.2} parent=0 // loop_footer_branch
    %9 = sbr.rel target = $region3
  $region8: #{block_forward.2} parent=0 // loop_exit
    _

</llo_original>
